<compile_context>
chip_gen: v7x
topology: tpu7x:2x2x1
jax: 0.10.0
libtpu: 0.0.40
codegen_flags: <defaults>
</compile_context>

<pallas_src>
import functools
import math

import jax
import jax.numpy as jnp
from jax.experimental import pallas as pl
from jax.experimental.pallas import tpu as pltpu

N_EMBD = 32          # config.N_EMBD (small synthetic size)
HIDDEN = N_EMBD * 4  # 128


def _gelu_tanh(x):
    # PyTorch nn.GELU(approximate='tanh'):
    # 0.5 * x * (1 + tanh(sqrt(2/pi) * (x + 0.044715 * x^3)))
    c = math.sqrt(2.0 / math.pi)
    return 0.5 * x * (1.0 + jnp.tanh(c * (x + 0.044715 * x * x * x)))


def mlp_kernel(x_ref, w1_ref, b1_ref, w2_ref, b2_ref, o_ref):
    # x arrives f32; cast to bf16 on the VPU here (cheaper than a wrapper pass).
    x_bf16 = x_ref[...].astype(jnp.bfloat16)
    h = jnp.dot(x_bf16, w1_ref[...],
                preferred_element_type=jnp.float32)          # (TM, Hk) f32
    h = _gelu_tanh(h + b1_ref[...])                          # f32 bias + GELU
    out = jnp.dot(h.astype(jnp.bfloat16), w2_ref[...],
                  preferred_element_type=jnp.float32)        # (TM, Dk) f32
    o_ref[...] = (out + b2_ref[...]).astype(o_ref.dtype)     # final dtype store


# ----------------------------- parameter prep -------------------------------
def _block_diag(w, pack):
    """pack copies of w on the diagonal: (d, h) -> (pack*d, pack*h)."""
    d, h = w.shape
    out = jnp.zeros((pack * d, pack * h), w.dtype)
    for p in range(pack):
        out = out.at[p * d:(p + 1) * d, p * h:(p + 1) * h].set(w)
    return out


def prepare_mlp_params(w1, b1, w2, b2):
    """One-time (per parameter update) packing + bf16 cast of the MLP weights.

    w1: (D, H); b1: (H,); w2: (H, D); b2: (D,)   (in_features x out_features,
    i.e. transposed relative to the PyTorch nn.Linear storage).
    """
    D, H = w1.shape
    assert w2.shape == (H, D) and b1.shape == (H,) and b2.shape == (D,)

    # Lane-density packing: if the feature dim is narrower than the 128-lane
    # vreg, pack `pack` consecutive tokens per row and replicate the weights
    # block-diagonally so the kernel's last dims are 128-lane dense (no masked
    # vst.msk partial stores).  Degenerates to pack=1 when D >= 128.
    pack = 128 // D if (D < 128 and 128 % D == 0) else 1
    if pack > 1:
        w1k = _block_diag(w1, pack)
        w2k = _block_diag(w2, pack)
        b1k = jnp.tile(b1.reshape(1, H), (1, pack))
        b2k = jnp.tile(b2.reshape(1, D), (1, pack))
    else:
        w1k, w2k = w1, w2
        b1k, b2k = b1.reshape(1, H), b2.reshape(1, D)

    return {
        "pack": pack, "d": D, "h": H,
        "w1k": w1k.astype(jnp.bfloat16),
        "w2k": w2k.astype(jnp.bfloat16),
        "b1k": b1k.astype(jnp.float32),
        "b2k": b2k.astype(jnp.float32),
    }


# ----------------------------- tiling helpers --------------------------------
def _round_up(a, b):
    return pl.cdiv(a, b) * b


@functools.lru_cache(maxsize=1)
def _num_tensorcores():
    """Best-effort per-chip TensorCore count (v7x has 2); defaults to 1."""
    try:
        info = pltpu.get_tpu_info()
    except Exception:
        return 1
    for name in ("num_cores", "core_count", "num_tensorcores",
                 "tensorcore_count", "cores_per_chip", "num_cores_per_chip"):
        v = getattr(info, name, None)
        try:
            if v is not None and int(v) > 0:
                return int(v)
        except (TypeError, ValueError):
            pass
    return 1


def _pallas_mlp(xk, w1k, b1k, w2k, b2k, *, tile_rows, grid, out_dtype, cost,
                buffered_weights):
    rows, Din = xk.shape
    Hk = w1k.shape[1]
    Dk = w2k.shape[1]

    def const_spec(shape):
        idx_map = lambda i, _s=len(shape): (0,) * _s
        if buffered_weights and hasattr(pl, "Buffered"):
            try:
                # Constant index_map -> no double-buffering needed; halves
                # resident-operand VMEM (matters on v7x's 64 MiB VMEM).
                return pl.BlockSpec(shape, idx_map, pipeline_mode=pl.Buffered(1))
            except TypeError:
                pass
        return pl.BlockSpec(shape, idx_map)

    return pl.pallas_call(
        mlp_kernel,
        out_shape=jax.ShapeDtypeStruct((rows, Dk), out_dtype),
        grid_spec=pltpu.PrefetchScalarGridSpec(
            num_scalar_prefetch=0,
            grid=grid,
            in_specs=[
                pl.BlockSpec((tile_rows, Din), lambda i: (i, 0)),  # x tile (f32)
                const_spec((Din, Hk)),                             # W1 (resident)
                const_spec((1, Hk)),                               # b1
                const_spec((Hk, Dk)),                              # W2 (resident)
                const_spec((1, Dk)),                               # b2
            ],
            out_specs=pl.BlockSpec((tile_rows, Dk), lambda i: (i, 0)),
        ),
        compiler_params=pltpu.CompilerParams(
            dimension_semantics=("parallel",)),
        cost_estimate=cost,
    )(xk, w1k, b1k, w2k, b2k)


# ----------------------------- forward ---------------------------------------
def mlp_forward(x, params, *, tile_rows_cap=1024):
    """Fused Linear -> GELU(tanh) -> Linear.

    x: (N, D) float32 activations; params: output of prepare_mlp_params().
    """
    N, D = x.shape
    assert D == params["d"], "feature dim mismatch with prepared params"
    pack, H = params["pack"], params["h"]
    w1k, b1k, w2k, b2k = params["w1k"], params["b1k"], params["w2k"], params["b2k"]
    out_dtype = x.dtype

    # ---- token padding to pack granularity (ragged N handled by padding) ----
    Npad = _round_up(N, pack)
    if Npad != N:
        x = jnp.pad(x, ((0, Npad - N), (0, 0)))
    rows = Npad // pack
    xk = x.reshape(rows, pack * D)            # free reshape (row-major), stays f32
    Din, Hk, Dk = pack * D, pack * H, pack * D

    # ---- row tiling ----------------------------------------------------------
    # Single large tile at toy sizes; cap 1024 rows (mult. of 8) at scale.
    # On chips with >=2 TensorCores (v7x) split into >=2 "parallel" tiles so
    # both cores get work.
    ncores = _num_tensorcores()
    if rows <= tile_rows_cap:
        if ncores >= 2 and rows >= 16:
            tile_rows = int(_round_up(pl.cdiv(rows, 2), 8))
        else:
            tile_rows = rows
    else:
        tile_rows = tile_rows_cap
    padded_rows = int(_round_up(rows, tile_rows))
    if padded_rows != rows:
        xk = jnp.pad(xk, ((0, padded_rows - rows), (0, 0)))
    grid = (padded_rows // tile_rows,)

    # Advisory cost estimate: counts the *useful* work (pack's block-diagonal
    # zero multiplies excluded) so XLA's scheduling isn't skewed by padding.
    out_bytes = jnp.dtype(out_dtype).itemsize
    flops = 4 * N * D * H                       # two matmuls, 2*N*D*H each
    cost = pl.CostEstimate(
        flops=int(flops),
        transcendentals=int(N * H),             # one tanh per hidden element
        bytes_accessed=int(xk.size * 4 + w1k.size * 2 + w2k.size * 2
                           + b1k.size * 4 + b2k.size * 4
                           + padded_rows * Dk * out_bytes))

    try:
        out = _pallas_mlp(xk, w1k, b1k, w2k, b2k, tile_rows=tile_rows,
                          grid=grid, out_dtype=out_dtype, cost=cost,
                          buffered_weights=True)
    except Exception:
        # Robust fallback if this JAX/Mosaic build rejects pipeline_mode=Buffered(1).
        out = _pallas_mlp(xk, w1k, b1k, w2k, b2k, tile_rows=tile_rows,
                          grid=grid, out_dtype=out_dtype, cost=cost,
                          buffered_weights=False)

    # Undo row padding / token packing (reshape is free; slice only if padded).
    out = out[:rows].reshape(rows * pack, D)
    return out[:N] if Npad != N else out


# ----------------------------- references ------------------------------------
def reference_mlp_f32(x, w1, b1, w2, b2):
    h = _gelu_tanh(x @ w1 + b1)
    return h @ w2 + b2


def reference_mlp_bf16(x, w1, b1, w2, b2):
    # Mirrors the kernel's numerics: bf16 MXU operands, f32 accumulation/GELU.
    h = jnp.dot(x.astype(jnp.bfloat16), w1.astype(jnp.bfloat16),
                preferred_element_type=jnp.float32) + b1
    h = _gelu_tanh(h)
    return jnp.dot(h.astype(jnp.bfloat16), w2.astype(jnp.bfloat16),
                   preferred_element_type=jnp.float32) + b2


if __name__ == "__main__":
    key = jax.random.PRNGKey(0)
    kx, k1, kb1, k2, kb2 = jax.random.split(key, 5)

    B, T = 2, 8                       # batch=2, seq=8  ->  16 tokens
    x = jax.random.normal(kx, (B, T, N_EMBD), dtype=jnp.float32)

    # Deterministic synthetic params (PyTorch Linear-style uniform init),
    # stored transposed: (in_features, out_features).
    bound1 = 1.0 / math.sqrt(N_EMBD)
    w1 = jax.random.uniform(k1, (N_EMBD, HIDDEN), jnp.float32, -bound1, bound1)
    b1 = jax.random.uniform(kb1, (HIDDEN,), jnp.float32, -bound1, bound1)
    bound2 = 1.0 / math.sqrt(HIDDEN)
    w2 = jax.random.uniform(k2, (HIDDEN, N_EMBD), jnp.float32, -bound2, bound2)
    b2 = jax.random.uniform(kb2, (N_EMBD,), jnp.float32, -bound2, bound2)

    # One-time parameter preparation (hoisted out of the per-call path).
    params = prepare_mlp_params(w1, b1, w2, b2)
    jax.block_until_ready(params)

    x_flat = x.reshape(B * T, N_EMBD)
    out_flat = mlp_forward(x_flat, params)
    out = out_flat.reshape(B, T, N_EMBD)
    jax.block_until_ready(out)

    # Tight check vs. a reference with identical (bf16-operand) numerics.
    ref_bf16 = reference_mlp_bf16(x_flat, w1, b1, w2, b2)
    assert jnp.allclose(out_flat, ref_bf16, atol=1e-4, rtol=1e-3), \
        "mismatch vs bf16-operand reference"
    # Loose check vs. the pure-f32 PyTorch-equivalent math (bf16 operand error).
    ref_f32 = reference_mlp_f32(x_flat, w1, b1, w2, b2)
    assert jnp.allclose(out_flat, ref_f32, atol=5e-2, rtol=5e-2), \
        "mismatch vs f32 reference"

    print("KERNEL_OK")
</pallas_src>

<mosaic_0001>
module attributes {stable_mosaic.version = 11 : i64} {
  func.func @mlp_kernel(%arg0: i32, %arg1: memref<4x128xf32, #tpu.memory_space<vmem>>, %arg2: memref<128x512xbf16, #tpu.memory_space<vmem>>, %arg3: memref<1x512xf32, #tpu.memory_space<vmem>>, %arg4: memref<512x128xbf16, #tpu.memory_space<vmem>>, %arg5: memref<1x128xf32, #tpu.memory_space<vmem>>, %arg6: memref<4x128xf32, #tpu.memory_space<vmem>>) attributes {dimension_semantics = [#tpu.dimension_semantics<parallel>], iteration_bounds = array<i64: 1>, scalar_prefetch = 0 : i64, scratch_operands = 0 : i64, tpu.core_type = #tpu.core_type<tc>, window_params = [{transform_indices = @transform_0, window_bounds = array<i64: 4, 128>}, {pipeline_mode = #tpu.pipeline_mode<synchronous>, transform_indices = @transform_1, window_bounds = array<i64: 128, 512>}, {pipeline_mode = #tpu.pipeline_mode<synchronous>, transform_indices = @transform_2, window_bounds = array<i64: 1, 512>}, {pipeline_mode = #tpu.pipeline_mode<synchronous>, transform_indices = @transform_3, window_bounds = array<i64: 512, 128>}, {pipeline_mode = #tpu.pipeline_mode<synchronous>, transform_indices = @transform_4, window_bounds = array<i64: 1, 128>}, {transform_indices = @transform_5, window_bounds = array<i64: 4, 128>}]} {
    %c0 = arith.constant 0 : index
    %c0_0 = arith.constant 0 : index
    %0 = vector.load %arg1[%c0, %c0_0] : memref<4x128xf32, #tpu.memory_space<vmem>>, vector<4x128xf32>
    %1 = arith.truncf %0 : vector<4x128xf32> to vector<4x128xbf16>
    %c0_1 = arith.constant 0 : index
    %c0_2 = arith.constant 0 : index
    %2 = vector.load %arg2[%c0_1, %c0_2] : memref<128x512xbf16, #tpu.memory_space<vmem>>, vector<128x512xbf16>
    %cst = arith.constant dense<0.000000e+00> : vector<4x512xf32>
    %3 = tpu.matmul %1, %2, %cst {dimension_numbers = #tpu.dot_dimension_numbers<[1], [0], [0], [1], [0, 0, 1, 1], [], []>} : vector<4x128xbf16>, vector<128x512xbf16>, vector<4x512xf32> -> vector<4x512xf32>
    %c0_3 = arith.constant 0 : index
    %c0_4 = arith.constant 0 : index
    %4 = vector.load %arg3[%c0_3, %c0_4] : memref<1x512xf32, #tpu.memory_space<vmem>>, vector<1x512xf32>
    %5 = vector.broadcast %4 : vector<1x512xf32> to vector<4x512xf32>
    %6 = arith.addf %3, %5 : vector<4x512xf32>
    %cst_5 = arith.constant 5.000000e-01 : f32
    %7 = vector.broadcast %cst_5 : f32 to vector<4x512xf32>
    %8 = arith.mulf %7, %6 : vector<4x512xf32>
    %cst_6 = arith.constant 4.471500e-02 : f32
    %9 = vector.broadcast %cst_6 : f32 to vector<4x512xf32>
    %10 = arith.mulf %9, %6 : vector<4x512xf32>
    %11 = arith.mulf %10, %6 : vector<4x512xf32>
    %12 = arith.mulf %11, %6 : vector<4x512xf32>
    %13 = arith.addf %6, %12 : vector<4x512xf32>
    %cst_7 = arith.constant 0.797884583 : f32
    %14 = vector.broadcast %cst_7 : f32 to vector<4x512xf32>
    %15 = arith.mulf %14, %13 : vector<4x512xf32>
    %16 = math.tanh %15 : vector<4x512xf32>
    %cst_8 = arith.constant 1.000000e+00 : f32
    %17 = vector.broadcast %cst_8 : f32 to vector<4x512xf32>
    %18 = arith.addf %17, %16 : vector<4x512xf32>
    %19 = arith.mulf %8, %18 : vector<4x512xf32>
    %20 = arith.truncf %19 : vector<4x512xf32> to vector<4x512xbf16>
    %c0_9 = arith.constant 0 : index
    %c0_10 = arith.constant 0 : index
    %21 = vector.load %arg4[%c0_9, %c0_10] : memref<512x128xbf16, #tpu.memory_space<vmem>>, vector<512x128xbf16>
    %cst_11 = arith.constant dense<0.000000e+00> : vector<4x128xf32>
    %22 = tpu.matmul %20, %21, %cst_11 {dimension_numbers = #tpu.dot_dimension_numbers<[1], [0], [0], [1], [0, 0, 1, 1], [], []>} : vector<4x512xbf16>, vector<512x128xbf16>, vector<4x128xf32> -> vector<4x128xf32>
    %c0_12 = arith.constant 0 : index
    %c0_13 = arith.constant 0 : index
    %23 = vector.load %arg5[%c0_12, %c0_13] : memref<1x128xf32, #tpu.memory_space<vmem>>, vector<1x128xf32>
    %24 = vector.broadcast %23 : vector<1x128xf32> to vector<4x128xf32>
    %25 = arith.addf %22, %24 : vector<4x128xf32>
    %c0_14 = arith.constant 0 : index
    %c0_15 = arith.constant 0 : index
    %26 = vector.load %arg6[%c0_14, %c0_15] : memref<4x128xf32, #tpu.memory_space<vmem>>, vector<4x128xf32>
    tpu.vector_store %arg6[%c0_14, %c0_15], %25 {strides = array<i32>} : memref<4x128xf32, #tpu.memory_space<vmem>>, vector<4x128xf32>,
    return
  }
  func.func @transform_0(%arg0: i32) -> (i32, i32) {
    %c0_i32 = arith.constant 0 : i32
    %c0_i32_0 = arith.constant 0 : i32
    return %arg0, %c0_i32 : i32, i32
  }
  func.func @transform_1(%arg0: i32) -> (i32, i32) {
    %c0_i32 = arith.constant 0 : i32
    %c0_i32_0 = arith.constant 0 : i32
    %c0_i32_1 = arith.constant 0 : i32
    return %c0_i32, %c0_i32_0 : i32, i32
  }
  func.func @transform_2(%arg0: i32) -> (i32, i32) {
    %c0_i32 = arith.constant 0 : i32
    %c0_i32_0 = arith.constant 0 : i32
    %c0_i32_1 = arith.constant 0 : i32
    return %c0_i32, %c0_i32_0 : i32, i32
  }
  func.func @transform_3(%arg0: i32) -> (i32, i32) {
    %c0_i32 = arith.constant 0 : i32
    %c0_i32_0 = arith.constant 0 : i32
    %c0_i32_1 = arith.constant 0 : i32
    return %c0_i32, %c0_i32_0 : i32, i32
  }
  func.func @transform_4(%arg0: i32) -> (i32, i32) {
    %c0_i32 = arith.constant 0 : i32
    %c0_i32_0 = arith.constant 0 : i32
    %c0_i32_1 = arith.constant 0 : i32
    return %c0_i32, %c0_i32_0 : i32, i32
  }
  func.func @transform_5(%arg0: i32) -> (i32, i32) {
    %c0_i32 = arith.constant 0 : i32
    %c0_i32_0 = arith.constant 0 : i32
    return %arg0, %c0_i32 : i32, i32
  }
}

module attributes {stable_mosaic.version = 11 : i64} {
  func.func @mlp_kernel(%arg0: i32, %arg1: memref<4x128xf32, #tpu.memory_space<vmem>>, %arg2: memref<128x512xbf16, #tpu.memory_space<vmem>>, %arg3: memref<1x512xf32, #tpu.memory_space<vmem>>, %arg4: memref<512x128xbf16, #tpu.memory_space<vmem>>, %arg5: memref<1x128xf32, #tpu.memory_space<vmem>>, %arg6: memref<4x128xf32, #tpu.memory_space<vmem>>) attributes {dimension_semantics = [#tpu.dimension_semantics<parallel>], iteration_bounds = array<i64: 1>, scalar_prefetch = 0 : i64, scratch_operands = 0 : i64, tpu.core_type = #tpu.core_type<tc>, window_params = [{transform_indices = @transform_0, window_bounds = array<i64: 4, 128>}, {pipeline_mode = #tpu.pipeline_mode<synchronous>, transform_indices = @transform_1, window_bounds = array<i64: 128, 512>}, {pipeline_mode = #tpu.pipeline_mode<synchronous>, transform_indices = @transform_2, window_bounds = array<i64: 1, 512>}, {pipeline_mode = #tpu.pipeline_mode<synchronous>, transform_indices = @transform_3, window_bounds = array<i64: 512, 128>}, {pipeline_mode = #tpu.pipeline_mode<synchronous>, transform_indices = @transform_4, window_bounds = array<i64: 1, 128>}, {transform_indices = @transform_5, window_bounds = array<i64: 4, 128>}]} {
    %c0 = arith.constant 0 : index
    %c0_0 = arith.constant 0 : index
    %0 = vector.load %arg1[%c0, %c0_0] : memref<4x128xf32, #tpu.memory_space<vmem>>, vector<4x128xf32>
    %1 = arith.truncf %0 : vector<4x128xf32> to vector<4x128xbf16>
    %c0_1 = arith.constant 0 : index
    %c0_2 = arith.constant 0 : index
    %2 = vector.load %arg2[%c0_1, %c0_2] : memref<128x512xbf16, #tpu.memory_space<vmem>>, vector<128x512xbf16>
    %cst = arith.constant dense<0.000000e+00> : vector<4x512xf32>
    %3 = tpu.matmul %1, %2, %cst {dimension_numbers = #tpu.dot_dimension_numbers<[1], [0], [0], [1], [0, 0, 1, 1], [], []>} : vector<4x128xbf16>, vector<128x512xbf16>, vector<4x512xf32> -> vector<4x512xf32>
    %c0_3 = arith.constant 0 : index
    %c0_4 = arith.constant 0 : index
    %4 = vector.load %arg3[%c0_3, %c0_4] : memref<1x512xf32, #tpu.memory_space<vmem>>, vector<1x512xf32>
    %5 = vector.broadcast %4 : vector<1x512xf32> to vector<4x512xf32>
    %6 = arith.addf %3, %5 : vector<4x512xf32>
    %cst_5 = arith.constant 5.000000e-01 : f32
    %7 = vector.broadcast %cst_5 : f32 to vector<4x512xf32>
    %8 = arith.mulf %7, %6 : vector<4x512xf32>
    %cst_6 = arith.constant 4.471500e-02 : f32
    %9 = vector.broadcast %cst_6 : f32 to vector<4x512xf32>
    %10 = arith.mulf %9, %6 : vector<4x512xf32>
    %11 = arith.mulf %10, %6 : vector<4x512xf32>
    %12 = arith.mulf %11, %6 : vector<4x512xf32>
    %13 = arith.addf %6, %12 : vector<4x512xf32>
    %cst_7 = arith.constant 0.797884583 : f32
    %14 = vector.broadcast %cst_7 : f32 to vector<4x512xf32>
    %15 = arith.mulf %14, %13 : vector<4x512xf32>
    %16 = math.tanh %15 : vector<4x512xf32>
    %cst_8 = arith.constant 1.000000e+00 : f32
    %17 = vector.broadcast %cst_8 : f32 to vector<4x512xf32>
    %18 = arith.addf %17, %16 : vector<4x512xf32>
    %19 = arith.mulf %8, %18 : vector<4x512xf32>
    %20 = arith.truncf %19 : vector<4x512xf32> to vector<4x512xbf16>
    %c0_9 = arith.constant 0 : index
    %c0_10 = arith.constant 0 : index
    %21 = vector.load %arg4[%c0_9, %c0_10] : memref<512x128xbf16, #tpu.memory_space<vmem>>, vector<512x128xbf16>
    %cst_11 = arith.constant dense<0.000000e+00> : vector<4x128xf32>
    %22 = tpu.matmul %20, %21, %cst_11 {dimension_numbers = #tpu.dot_dimension_numbers<[1], [0], [0], [1], [0, 0, 1, 1], [], []>} : vector<4x512xbf16>, vector<512x128xbf16>, vector<4x128xf32> -> vector<4x128xf32>
    %c0_12 = arith.constant 0 : index
    %c0_13 = arith.constant 0 : index
    %23 = vector.load %arg5[%c0_12, %c0_13] : memref<1x128xf32, #tpu.memory_space<vmem>>, vector<1x128xf32>
    %24 = vector.broadcast %23 : vector<1x128xf32> to vector<4x128xf32>
    %25 = arith.addf %22, %24 : vector<4x128xf32>
    %c0_14 = arith.constant 0 : index
    %c0_15 = arith.constant 0 : index
    %26 = vector.load %arg6[%c0_14, %c0_15] : memref<4x128xf32, #tpu.memory_space<vmem>>, vector<4x128xf32>
    tpu.vector_store %arg6[%c0_14, %c0_15], %25 {strides = array<i32>} : memref<4x128xf32, #tpu.memory_space<vmem>>, vector<4x128xf32>,
    return
  }
  func.func @transform_0(%arg0: i32) -> (i32, i32) {
    %c0_i32 = arith.constant 0 : i32
    %c0_i32_0 = arith.constant 0 : i32
    return %arg0, %c0_i32 : i32, i32
  }
  func.func @transform_1(%arg0: i32) -> (i32, i32) {
    %c0_i32 = arith.constant 0 : i32
    %c0_i32_0 = arith.constant 0 : i32
    %c0_i32_1 = arith.constant 0 : i32
    return %c0_i32, %c0_i32_0 : i32, i32
  }
  func.func @transform_2(%arg0: i32) -> (i32, i32) {
    %c0_i32 = arith.constant 0 : i32
    %c0_i32_0 = arith.constant 0 : i32
    %c0_i32_1 = arith.constant 0 : i32
    return %c0_i32, %c0_i32_0 : i32, i32
  }
  func.func @transform_3(%arg0: i32) -> (i32, i32) {
    %c0_i32 = arith.constant 0 : i32
    %c0_i32_0 = arith.constant 0 : i32
    %c0_i32_1 = arith.constant 0 : i32
    return %c0_i32, %c0_i32_0 : i32, i32
  }
  func.func @transform_4(%arg0: i32) -> (i32, i32) {
    %c0_i32 = arith.constant 0 : i32
    %c0_i32_0 = arith.constant 0 : i32
    %c0_i32_1 = arith.constant 0 : i32
    return %c0_i32, %c0_i32_0 : i32, i32
  }
  func.func @transform_5(%arg0: i32) -> (i32, i32) {
    %c0_i32 = arith.constant 0 : i32
    %c0_i32_0 = arith.constant 0 : i32
    return %arg0, %c0_i32 : i32, i32
  }
}

</mosaic_0001>

<llo_original>
// kernel: tpu_custom_call.1
$region0: #{tpu_custom_call.1}
  #allocation0 [shape = 'u32[]', space=smem, size = 0x4, offset = 0x4, fixed_abs, tag = 'smem constant byte address 0x4 - core index']
  #allocation1 [shape = 'u32[144,128]{1,0:T(1,128)}', space=vmem, size = 0x12000, scoped, tag = 'internal scratch']
  %s0 = inlined_call_operand.hbm [shape: f32[4,128], index: 0, kind: input, shape index: {}]
  %s1 = inlined_call_operand.hbm [shape: bf16[128,512], index: 1, kind: input, shape index: {}]
  %s2 = inlined_call_operand.vmem [shape: f32[1,512], index: 2, kind: input, shape index: {}]
  %s3 = inlined_call_operand.hbm [shape: bf16[512,128], index: 3, kind: input, shape index: {}]
  %s4 = inlined_call_operand.vmem [shape: f32[1,128], index: 4, kind: input, shape index: {}]
  %s5 = inlined_call_operand.hbm [shape: f32[4,128], index: 5, kind: output, shape index: {}]
  %s6 = sld [smem:[#allocation0]]
  $region42: #{tpu_custom_call.1} parent=0
    _
  %s8 = ssub.s32 1, %s6
  %s9 = scalar_select 0, %s8, %s6
  $region1: #{tpu_custom_call.1} parent=0
    #allocation2 [shape = 'u8[2048]{0}', space=vmem, size = 0x800, scoped, tag = 'input window, operand 0, single buffered']
    #allocation3 [shape = 's32[1]{0}', space=sflag, size = 0x4, scoped, tag = 'scoped memory for tpu_custom_call.1']
    #allocation4 [shape = 's32[1]{0}', space=sflag, size = 0x4, scoped, tag = 'scoped memory for tpu_custom_call.1']
    #allocation5 [shape = 'u8[131072]{0}', space=vmem, size = 0x20000, scoped, tag = 'input window, operand 1, single buffered']
    #allocation6 [shape = 's32[1]{0}', space=sflag, size = 0x4, scoped, tag = 'scoped memory for tpu_custom_call.1']
    #allocation7 [shape = 'u8[131072]{0}', space=vmem, size = 0x20000, scoped, tag = 'input window, operand 3, single buffered']
    #allocation8 [shape = 'u8[2048]{0}', space=vmem, size = 0x800, scoped, tag = 'output window, operand 0, single buffered']
    %10 = vsyncpa [#allocation3], 0
    %11 = vsyncpa [#allocation6], 0
    %12 = vsyncpa [#allocation4], 0
    // Predicated region
    $region2: #{tpu_custom_call.1} parent=1 // pred_check
      _
    $region3: #{tpu_custom_call.1} parent=1 // pred_check_branch
      %14 = sbr.rel (0) target = $region5
    $region4: #{tpu_custom_call.1} parent=1 // pred_region
      %s16 = ssub.s32 64, 64
      %17 = vsyncadd [#allocation3], %s16
      %s19 = sshll.u32 [#allocation2], 4
      %s20 = int_to_ptr.vmem [resolvable:$true] %s19
      %22 = dma.hbm_to_vmem [thread:$0]  %s0, 64, %s20, [#allocation3]
    $region5: #{tpu_custom_call.1} parent=1 // pred_fallthru
      _
    // Predicated region
    $region6: #{tpu_custom_call.1} parent=1 // pred_check
      _
    $region7: #{tpu_custom_call.1} parent=1 // pred_check_branch
      %24 = sbr.rel (0) target = $region9
    $region8: #{tpu_custom_call.1} parent=1 // pred_region
      %s26 = ssub.s32 4096, 4096
      %27 = vsyncadd [#allocation6], %s26
      %s28 = sshll.u32 [#allocation5], 4
      %s29 = int_to_ptr.vmem [resolvable:$true] %s28
      %34 = dma.hbm_to_vmem [thread:$0]  %s1, 4096, %s29, [#allocation6], 256, 256, 16
    $region9: #{tpu_custom_call.1} parent=1 // pred_fallthru
      _
    // Predicated region
    $region10: #{tpu_custom_call.1} parent=1 // pred_check
      _
    $region11: #{tpu_custom_call.1} parent=1 // pred_check_branch
      %36 = sbr.rel (0) target = $region13
    $region12: #{tpu_custom_call.1} parent=1 // pred_region
      _
    $region13: #{tpu_custom_call.1} parent=1 // pred_fallthru
      _
    // Predicated region
    $region14: #{tpu_custom_call.1} parent=1 // pred_check
      _
    $region15: #{tpu_custom_call.1} parent=1 // pred_check_branch
      %38 = sbr.rel (0) target = $region17
    $region16: #{tpu_custom_call.1} parent=1 // pred_region
      %s40 = ssub.s32 4096, 4096
      %41 = vsyncadd [#allocation6], %s40
      %s42 = sshll.u32 [#allocation7], 4
      %s43 = int_to_ptr.vmem [resolvable:$true] %s42
      %48 = dma.hbm_to_vmem [thread:$0]  %s3, 4096, %s43, [#allocation6], 64, 64, 4
    $region17: #{tpu_custom_call.1} parent=1 // pred_fallthru
      _
    // Predicated region
    $region18: #{tpu_custom_call.1} parent=1 // pred_check
      _
    $region19: #{tpu_custom_call.1} parent=1 // pred_check_branch
      %50 = sbr.rel (0) target = $region21
    $region20: #{tpu_custom_call.1} parent=1 // pred_region
      _
    $region21: #{tpu_custom_call.1} parent=1 // pred_fallthru
      _
    // Predicated region
    $region22: #{tpu_custom_call.1} parent=1 // pred_check
      _
    $region23: #{tpu_custom_call.1} parent=1 // pred_check_branch
      %52 = sbr.rel (0) target = $region25
    $region24: #{tpu_custom_call.1} parent=1 // pred_region
      %53 = dma.done [#allocation3], 64
    $region25: #{tpu_custom_call.1} parent=1 // pred_fallthru
      _
    // Predicated region
    $region26: #{tpu_custom_call.1} parent=1 // pred_check
      _
    $region27: #{tpu_custom_call.1} parent=1 // pred_check_branch
      %55 = sbr.rel (0) target = $region29
    $region28: #{tpu_custom_call.1} parent=1 // pred_region
      %56 = dma.done [#allocation6], 4096
    $region29: #{tpu_custom_call.1} parent=1 // pred_fallthru
      _
    // Predicated region
    $region30: #{tpu_custom_call.1} parent=1 // pred_check
      _
    $region31: #{tpu_custom_call.1} parent=1 // pred_check_branch
      %58 = sbr.rel (0) target = $region33
    $region32: #{tpu_custom_call.1} parent=1 // pred_region
      %59 = dma.done [#allocation6], 4096
    $region33: #{tpu_custom_call.1} parent=1 // pred_fallthru
      _
    %v61 = vld [vmem:[#allocation2] sm:$0xf]
    %v62 = vpack.c.bf16 %v61, %v61
    %v63 = vld [vmem:[#allocation5] sm:$0xff]
    %v64 = vld [vmem:[#allocation5 + $0x8] sm:$0xff]
    %v65 = vld [vmem:[#allocation5 + $0x10] sm:$0xff]
    %v66 = vld [vmem:[#allocation5 + $0x18] sm:$0xff]
    %v67 = vld [vmem:[#allocation5 + $0x20] sm:$0xff]
    %v68 = vld [vmem:[#allocation5 + $0x28] sm:$0xff]
    %v69 = vld [vmem:[#allocation5 + $0x30] sm:$0xff]
    %v70 = vld [vmem:[#allocation5 + $0x38] sm:$0xff]
    %v71 = vld [vmem:[#allocation5 + $0x40] sm:$0xff]
    %v72 = vld [vmem:[#allocation5 + $0x48] sm:$0xff]
    %v73 = vld [vmem:[#allocation5 + $0x50] sm:$0xff]
    %v74 = vld [vmem:[#allocation5 + $0x58] sm:$0xff]
    %v75 = vld [vmem:[#allocation5 + $0x60] sm:$0xff]
    %v76 = vld [vmem:[#allocation5 + $0x68] sm:$0xff]
    %v77 = vld [vmem:[#allocation5 + $0x70] sm:$0xff]
    %v78 = vld [vmem:[#allocation5 + $0x78] sm:$0xff]
    %v79 = vld [vmem:[#allocation5 + $0x80] sm:$0xff]
    %v80 = vld [vmem:[#allocation5 + $0x88] sm:$0xff]
    %v81 = vld [vmem:[#allocation5 + $0x90] sm:$0xff]
    %v82 = vld [vmem:[#allocation5 + $0x98] sm:$0xff]
    %v83 = vld [vmem:[#allocation5 + $0xa0] sm:$0xff]
    %v84 = vld [vmem:[#allocation5 + $0xa8] sm:$0xff]
    %v85 = vld [vmem:[#allocation5 + $0xb0] sm:$0xff]
    %v86 = vld [vmem:[#allocation5 + $0xb8] sm:$0xff]
    %v87 = vld [vmem:[#allocation5 + $0xc0] sm:$0xff]
    %v88 = vld [vmem:[#allocation5 + $0xc8] sm:$0xff]
    %v89 = vld [vmem:[#allocation5 + $0xd0] sm:$0xff]
    %v90 = vld [vmem:[#allocation5 + $0xd8] sm:$0xff]
    %v91 = vld [vmem:[#allocation5 + $0xe0] sm:$0xff]
    %v92 = vld [vmem:[#allocation5 + $0xe8] sm:$0xff]
    %v93 = vld [vmem:[#allocation5 + $0xf0] sm:$0xff]
    %v94 = vld [vmem:[#allocation5 + $0xf8] sm:$0xff]
    %v95 = vld [vmem:[%s2] sm:$0xf]
    %v97 = vlaneseq
    %v98 = vshrl.u32 %v97, 7
    %v99 = vsub.s32 0, %v98
    %v100 = vrot.slane %v95, %v99
    %v101 = vlaneseq
    %v102 = vshrl.u32 %v101, 7
    %v103 = vsub.s32 1, %v102
    %v104 = vrot.slane %v95, %v103
    %v105 = vlaneseq
    %v106 = vshrl.u32 %v105, 7
    %v107 = vsub.s32 2, %v106
    %v108 = vrot.slane %v95, %v107
    %v109 = vlaneseq
    %v110 = vshrl.u32 %v109, 7
    %v111 = vsub.s32 3, %v110
    %v112 = vrot.slane %v95, %v111
    %v149 = vunpack.c.l.b16 %v63
    %v150 = vunpack.c.h.b16 %v63
    %v151 = vunpack.c.l.b16 %v64
    %v152 = vunpack.c.h.b16 %v64
    %v153 = vunpack.c.l.b16 %v65
    %v154 = vunpack.c.h.b16 %v65
    %v155 = vunpack.c.l.b16 %v66
    %v156 = vunpack.c.h.b16 %v66
    %v157 = vunpack.c.l.b16 %v67
    %v158 = vunpack.c.h.b16 %v67
    %v159 = vunpack.c.l.b16 %v68
    %v160 = vunpack.c.h.b16 %v68
    %v161 = vunpack.c.l.b16 %v69
    %v162 = vunpack.c.h.b16 %v69
    %v163 = vunpack.c.l.b16 %v70
    %v164 = vunpack.c.h.b16 %v70
    %v165 = vunpack.c.l.b16 %v71
    %v166 = vunpack.c.h.b16 %v71
    %v167 = vunpack.c.l.b16 %v72
    %v168 = vunpack.c.h.b16 %v72
    %v169 = vunpack.c.l.b16 %v73
    %v170 = vunpack.c.h.b16 %v73
    %v171 = vunpack.c.l.b16 %v74
    %v172 = vunpack.c.h.b16 %v74
    %v173 = vunpack.c.l.b16 %v75
    %v174 = vunpack.c.h.b16 %v75
    %v175 = vunpack.c.l.b16 %v76
    %v176 = vunpack.c.h.b16 %v76
    %v177 = vunpack.c.l.b16 %v77
    %v178 = vunpack.c.h.b16 %v77
    %v179 = vunpack.c.l.b16 %v78
    %v180 = vunpack.c.h.b16 %v78
    %v181 = vunpack.c.l.b16 %v79
    %v182 = vunpack.c.h.b16 %v79
    %v183 = vunpack.c.l.b16 %v80
    %v184 = vunpack.c.h.b16 %v80
    %v185 = vunpack.c.l.b16 %v81
    %v186 = vunpack.c.h.b16 %v81
    %v187 = vunpack.c.l.b16 %v82
    %v188 = vunpack.c.h.b16 %v82
    %v189 = vunpack.c.l.b16 %v83
    %v190 = vunpack.c.h.b16 %v83
    %v191 = vunpack.c.l.b16 %v84
    %v192 = vunpack.c.h.b16 %v84
    %v193 = vunpack.c.l.b16 %v85
    %v194 = vunpack.c.h.b16 %v85
    %v195 = vunpack.c.l.b16 %v86
    %v196 = vunpack.c.h.b16 %v86
    %v197 = vunpack.c.l.b16 %v87
    %v198 = vunpack.c.h.b16 %v87
    %v199 = vunpack.c.l.b16 %v88
    %v200 = vunpack.c.h.b16 %v88
    %v201 = vunpack.c.l.b16 %v89
    %v202 = vunpack.c.h.b16 %v89
    %v203 = vunpack.c.l.b16 %v90
    %v204 = vunpack.c.h.b16 %v90
    %v205 = vunpack.c.l.b16 %v91
    %v206 = vunpack.c.h.b16 %v91
    %v207 = vunpack.c.l.b16 %v92
    %v208 = vunpack.c.h.b16 %v92
    %v209 = vunpack.c.l.b16 %v93
    %v210 = vunpack.c.h.b16 %v93
    %v211 = vunpack.c.l.b16 %v94
    %v212 = vunpack.c.h.b16 %v94
    %v213 = vpack.c.b16 %v153, %v149
    %v214 = vpack.c.b16 %v154, %v150
    %v215 = vpack.c.b16 %v155, %v151
    %v216 = vpack.c.b16 %v156, %v152
    %v217 = vpack.c.b16 %v161, %v157
    %v218 = vpack.c.b16 %v162, %v158
    %v219 = vpack.c.b16 %v163, %v159
    %v220 = vpack.c.b16 %v164, %v160
    %v221 = vpack.c.b16 %v169, %v165
    %v222 = vpack.c.b16 %v170, %v166
    %v223 = vpack.c.b16 %v171, %v167
    %v224 = vpack.c.b16 %v172, %v168
    %v225 = vpack.c.b16 %v177, %v173
    %v226 = vpack.c.b16 %v178, %v174
    %v227 = vpack.c.b16 %v179, %v175
    %v228 = vpack.c.b16 %v180, %v176
    %v229 = vpack.c.b16 %v185, %v181
    %v230 = vpack.c.b16 %v186, %v182
    %v231 = vpack.c.b16 %v187, %v183
    %v232 = vpack.c.b16 %v188, %v184
    %v233 = vpack.c.b16 %v193, %v189
    %v234 = vpack.c.b16 %v194, %v190
    %v235 = vpack.c.b16 %v195, %v191
    %v236 = vpack.c.b16 %v196, %v192
    %v237 = vpack.c.b16 %v201, %v197
    %v238 = vpack.c.b16 %v202, %v198
    %v239 = vpack.c.b16 %v203, %v199
    %v240 = vpack.c.b16 %v204, %v200
    %v241 = vpack.c.b16 %v209, %v205
    %v242 = vpack.c.b16 %v210, %v206
    %v243 = vpack.c.b16 %v211, %v207
    %v244 = vpack.c.b16 %v212, %v208
    %277 = vmatprep.subr.bf16.mxu0 %v214
    %278 = vmatpush1.bf16.msra.mxu0 %v213
    %279 = vmatprep.subr.bf16.mxu0 %v218
    %280 = vmatpush1.bf16.msra.mxu0 %v217
    %281 = vmatprep.subr.bf16.mxu0 %v222
    %282 = vmatpush1.bf16.msra.mxu0 %v221
    %283 = vmatprep.subr.bf16.mxu0 %v226
    %284 = vmatpush1.bf16.msra.mxu0 %v225
    %285 = vmatprep.subr.bf16.mxu0 %v230
    %286 = vmatpush1.bf16.msra.mxu0 %v229
    %287 = vmatprep.subr.bf16.mxu0 %v234
    %288 = vmatpush1.bf16.msra.mxu0 %v233
    %289 = vmatprep.subr.bf16.mxu0 %v238
    %290 = vmatpush1.bf16.msra.mxu0 %v237
    %291 = vmatprep.subr.bf16.mxu0 %v242
    %292 = vmatpush1.bf16.msra.mxu0 %v241
    %293 = vmatprep.subr.bf16.mxu0 0
    %294 = vmatpush1.bf16.msra.mxu0 0
    %295 = vmatprep.subr.bf16.mxu0 0
    %296 = vmatpush1.bf16.msra.mxu0 0
    %297 = vmatprep.subr.bf16.mxu0 0
    %298 = vmatpush1.bf16.msra.mxu0 0
    %299 = vmatprep.subr.bf16.mxu0 0
    %300 = vmatpush1.bf16.msra.mxu0 0
    %301 = vmatprep.subr.bf16.mxu0 0
    %302 = vmatpush1.bf16.msra.mxu0 0
    %303 = vmatprep.subr.bf16.mxu0 0
    %304 = vmatpush1.bf16.msra.mxu0 0
    %305 = vmatprep.subr.bf16.mxu0 0
    %306 = vmatpush1.bf16.msra.mxu0 0
    %307 = vmatprep.subr.bf16.mxu0 0
    %308 = vmatpush1.bf16.msra.mxu0 0
    %309 = vmatprep.mubr.bf16.mxu0 0
    %310 = vmatmul.mubr.bf16.gmra.mrb[0].mxu0 %v62
    %v311 = vpop.f32.mrb[0].mxu0
    %v312 = vadd.f32 %v100, %v311
    %v313 = vpop.f32.mrb[0].mxu0
    %v314 = vadd.f32 %v104, %v313
    %v315 = vpop.f32.mrb[0].mxu0
    %v316 = vpop.f32.mrb[0].mxu0
    %317 = vdwg.mxu0
    %318 = vmatprep.subr.bf16.mxu0 %v216
    %319 = vmatpush1.bf16.msra.mxu0 %v215
    %320 = vmatprep.subr.bf16.mxu0 %v220
    %321 = vmatpush1.bf16.msra.mxu0 %v219
    %322 = vmatprep.subr.bf16.mxu0 %v224
    %323 = vmatpush1.bf16.msra.mxu0 %v223
    %324 = vmatprep.subr.bf16.mxu0 %v228
    %325 = vmatpush1.bf16.msra.mxu0 %v227
    %326 = vmatprep.subr.bf16.mxu0 %v232
    %327 = vmatpush1.bf16.msra.mxu0 %v231
    %328 = vmatprep.subr.bf16.mxu0 %v236
    %329 = vmatpush1.bf16.msra.mxu0 %v235
    %330 = vmatprep.subr.bf16.mxu0 %v240
    %331 = vmatpush1.bf16.msra.mxu0 %v239
    %332 = vmatprep.subr.bf16.mxu0 %v244
    %333 = vmatpush1.bf16.msra.mxu0 %v243
    %334 = vmatprep.subr.bf16.mxu0 0
    %335 = vmatpush1.bf16.msra.mxu0 0
    %336 = vmatprep.subr.bf16.mxu0 0
    %337 = vmatpush1.bf16.msra.mxu0 0
    %338 = vmatprep.subr.bf16.mxu0 0
    %339 = vmatpush1.bf16.msra.mxu0 0
    %340 = vmatprep.subr.bf16.mxu0 0
    %341 = vmatpush1.bf16.msra.mxu0 0
    %342 = vmatprep.subr.bf16.mxu0 0
    %343 = vmatpush1.bf16.msra.mxu0 0
    %344 = vmatprep.subr.bf16.mxu0 0
    %345 = vmatpush1.bf16.msra.mxu0 0
    %346 = vmatprep.subr.bf16.mxu0 0
    %347 = vmatpush1.bf16.msra.mxu0 0
    %348 = vmatprep.subr.bf16.mxu0 0
    %349 = vmatpush1.bf16.msra.mxu0 0
    %350 = vmatprep.mubr.bf16.mxu0 0
    %351 = vmatmul.mubr.bf16.gmra.mrb[0].mxu0 %v62
    %v352 = vpop.f32.mrb[0].mxu0
    %v353 = vadd.f32 %v108, %v352
    %v354 = vpop.f32.mrb[0].mxu0
    %v355 = vadd.f32 %v112, %v354
    %v356 = vpop.f32.mrb[0].mxu0
    %v357 = vpop.f32.mrb[0].mxu0
    %358 = vdwg.mxu0
    %v359 = vmul.f32 %v312, 0.5
    %v360 = vmul.f32 %v314, 0.5
    %v361 = vmul.f32 %v353, 0.5
    %v362 = vmul.f32 %v355, 0.5
    %v363 = vmul.f32 %v312, 0.044715
    %v364 = vmul.f32 %v314, 0.044715
    %v365 = vmul.f32 %v353, 0.044715
    %v366 = vmul.f32 %v355, 0.044715
    %v367 = vmul.f32 %v363, %v312
    %v368 = vmul.f32 %v364, %v314
    %v369 = vmul.f32 %v365, %v353
    %v370 = vmul.f32 %v366, %v355
    %v371 = vmul.f32 %v367, %v312
    %v372 = vmul.f32 %v368, %v314
    %v373 = vmul.f32 %v369, %v353
    %v374 = vmul.f32 %v370, %v355
    %v375 = vadd.f32 %v312, %v371
    %v376 = vadd.f32 %v314, %v372
    %v377 = vadd.f32 %v353, %v373
    %v378 = vadd.f32 %v355, %v374
    %v379 = vmul.f32 %v375, 0.7978846
    %v380 = vmul.f32 %v376, 0.7978846
    %v381 = vmul.f32 %v377, 0.7978846
    %v382 = vmul.f32 %v378, 0.7978846
    %v383 = vtanh.pop %v379
    %v384 = vtanh.pop %v380
    %v385 = vtanh.pop %v381
    %v386 = vtanh.pop %v382
    %v387 = vadd.f32 %v383, 1.0
    %v388 = vadd.f32 %v384, 1.0
    %v389 = vadd.f32 %v385, 1.0
    %v390 = vadd.f32 %v386, 1.0
    %v391 = vmul.f32 %v359, %v387
    %v392 = vmul.f32 %v360, %v388
    %v393 = vmul.f32 %v361, %v389
    %v394 = vmul.f32 %v362, %v390
    %v395 = vpack.c.bf16 %v391, %v391
    %v396 = vpack.c.bf16 %v392, %v392
    %v397 = vpack.c.bf16 %v393, %v393
    %v398 = vpack.c.bf16 %v394, %v394
    %v399 = vld [vmem:[#allocation7] sm:$0xf]
    %v400 = vld [vmem:[#allocation7 + $0x4] sm:$0xf]
    %v401 = vld [vmem:[#allocation7 + $0x8] sm:$0xf]
    %v402 = vld [vmem:[#allocation7 + $0xc] sm:$0xf]
    %v403 = vld [vmem:[#allocation7 + $0x10] sm:$0xf]
    %v404 = vld [vmem:[#allocation7 + $0x14] sm:$0xf]
    %v405 = vld [vmem:[#allocation7 + $0x18] sm:$0xf]
    %v406 = vld [vmem:[#allocation7 + $0x1c] sm:$0xf]
    %v407 = vld [vmem:[#allocation7 + $0x20] sm:$0xf]
    %v408 = vld [vmem:[#allocation7 + $0x24] sm:$0xf]
    %v409 = vld [vmem:[#allocation7 + $0x28] sm:$0xf]
    %v410 = vld [vmem:[#allocation7 + $0x2c] sm:$0xf]
    %v411 = vld [vmem:[#allocation7 + $0x30] sm:$0xf]
    %v412 = vld [vmem:[#allocation7 + $0x34] sm:$0xf]
    %v413 = vld [vmem:[#allocation7 + $0x38] sm:$0xf]
    %v414 = vld [vmem:[#allocation7 + $0x3c] sm:$0xf]
    %v415 = vld [vmem:[#allocation7 + $0x40] sm:$0xf]
    %v416 = vld [vmem:[#allocation7 + $0x44] sm:$0xf]
    %v417 = vld [vmem:[#allocation7 + $0x48] sm:$0xf]
    %v418 = vld [vmem:[#allocation7 + $0x4c] sm:$0xf]
    %v419 = vld [vmem:[#allocation7 + $0x50] sm:$0xf]
    %v420 = vld [vmem:[#allocation7 + $0x54] sm:$0xf]
    %v421 = vld [vmem:[#allocation7 + $0x58] sm:$0xf]
    %v422 = vld [vmem:[#allocation7 + $0x5c] sm:$0xf]
    %v423 = vld [vmem:[#allocation7 + $0x60] sm:$0xf]
    %v424 = vld [vmem:[#allocation7 + $0x64] sm:$0xf]
    %v425 = vld [vmem:[#allocation7 + $0x68] sm:$0xf]
    %v426 = vld [vmem:[#allocation7 + $0x6c] sm:$0xf]
    %v427 = vld [vmem:[#allocation7 + $0x70] sm:$0xf]
    %v428 = vld [vmem:[#allocation7 + $0x74] sm:$0xf]
    %v429 = vld [vmem:[#allocation7 + $0x78] sm:$0xf]
    %v430 = vld [vmem:[#allocation7 + $0x7c] sm:$0xf]
    %v431 = vld [vmem:[#allocation7 + $0x80] sm:$0xf]
    %v432 = vld [vmem:[#allocation7 + $0x84] sm:$0xf]
    %v433 = vld [vmem:[#allocation7 + $0x88] sm:$0xf]
    %v434 = vld [vmem:[#allocation7 + $0x8c] sm:$0xf]
    %v435 = vld [vmem:[#allocation7 + $0x90] sm:$0xf]
    %v436 = vld [vmem:[#allocation7 + $0x94] sm:$0xf]
    %v437 = vld [vmem:[#allocation7 + $0x98] sm:$0xf]
    %v438 = vld [vmem:[#allocation7 + $0x9c] sm:$0xf]
    %v439 = vld [vmem:[#allocation7 + $0xa0] sm:$0xf]
    %v440 = vld [vmem:[#allocation7 + $0xa4] sm:$0xf]
    %v441 = vld [vmem:[#allocation7 + $0xa8] sm:$0xf]
    %v442 = vld [vmem:[#allocation7 + $0xac] sm:$0xf]
    %v443 = vld [vmem:[#allocation7 + $0xb0] sm:$0xf]
    %v444 = vld [vmem:[#allocation7 + $0xb4] sm:$0xf]
    %v445 = vld [vmem:[#allocation7 + $0xb8] sm:$0xf]
    %v446 = vld [vmem:[#allocation7 + $0xbc] sm:$0xf]
    %v447 = vld [vmem:[#allocation7 + $0xc0] sm:$0xf]
    %v448 = vld [vmem:[#allocation7 + $0xc4] sm:$0xf]
    %v449 = vld [vmem:[#allocation7 + $0xc8] sm:$0xf]
    %v450 = vld [vmem:[#allocation7 + $0xcc] sm:$0xf]
    %v451 = vld [vmem:[#allocation7 + $0xd0] sm:$0xf]
    %v452 = vld [vmem:[#allocation7 + $0xd4] sm:$0xf]
    %v453 = vld [vmem:[#allocation7 + $0xd8] sm:$0xf]
    %v454 = vld [vmem:[#allocation7 + $0xdc] sm:$0xf]
    %v455 = vld [vmem:[#allocation7 + $0xe0] sm:$0xf]
    %v456 = vld [vmem:[#allocation7 + $0xe4] sm:$0xf]
    %v457 = vld [vmem:[#allocation7 + $0xe8] sm:$0xf]
    %v458 = vld [vmem:[#allocation7 + $0xec] sm:$0xf]
    %v459 = vld [vmem:[#allocation7 + $0xf0] sm:$0xf]
    %v460 = vld [vmem:[#allocation7 + $0xf4] sm:$0xf]
    %v461 = vld [vmem:[#allocation7 + $0xf8] sm:$0xf]
    %v462 = vld [vmem:[#allocation7 + $0xfc] sm:$0xf]
    %v463 = vld [vmem:[%s4] sm:$0x1]
    %v465 = vlaneseq
    %v466 = vshrl.u32 %v465, 7
    %v467 = vsub.s32 0, %v466
    %v468 = vrot.slane %v463, %v467
    %v534 = vunpack.c.l.b16 %v399
    %v535 = vunpack.c.l.b16 %v400
    %v536 = vunpack.c.l.b16 %v401
    %v537 = vunpack.c.l.b16 %v402
    %v538 = vunpack.c.l.b16 %v403
    %v539 = vunpack.c.l.b16 %v404
    %v540 = vunpack.c.l.b16 %v405
    %v541 = vunpack.c.l.b16 %v406
    %v542 = vunpack.c.l.b16 %v407
    %v543 = vunpack.c.l.b16 %v408
    %v544 = vunpack.c.l.b16 %v409
    %v545 = vunpack.c.l.b16 %v410
    %v546 = vunpack.c.l.b16 %v411
    %v547 = vunpack.c.l.b16 %v412
    %v548 = vunpack.c.l.b16 %v413
    %v549 = vunpack.c.l.b16 %v414
    %v550 = vunpack.c.l.b16 %v415
    %v551 = vunpack.c.l.b16 %v416
    %v552 = vunpack.c.l.b16 %v417
    %v553 = vunpack.c.l.b16 %v418
    %v554 = vunpack.c.l.b16 %v419
    %v555 = vunpack.c.l.b16 %v420
    %v556 = vunpack.c.l.b16 %v421
    %v557 = vunpack.c.l.b16 %v422
    %v558 = vunpack.c.l.b16 %v423
    %v559 = vunpack.c.l.b16 %v424
    %v560 = vunpack.c.l.b16 %v425
    %v561 = vunpack.c.l.b16 %v426
    %v562 = vunpack.c.l.b16 %v427
    %v563 = vunpack.c.l.b16 %v428
    %v564 = vunpack.c.l.b16 %v429
    %v565 = vunpack.c.l.b16 %v430
    %v566 = vunpack.c.l.b16 %v431
    %v567 = vunpack.c.l.b16 %v432
    %v568 = vunpack.c.l.b16 %v433
    %v569 = vunpack.c.l.b16 %v434
    %v570 = vunpack.c.l.b16 %v435
    %v571 = vunpack.c.l.b16 %v436
    %v572 = vunpack.c.l.b16 %v437
    %v573 = vunpack.c.l.b16 %v438
    %v574 = vunpack.c.l.b16 %v439
    %v575 = vunpack.c.l.b16 %v440
    %v576 = vunpack.c.l.b16 %v441
    %v577 = vunpack.c.l.b16 %v442
    %v578 = vunpack.c.l.b16 %v443
    %v579 = vunpack.c.l.b16 %v444
    %v580 = vunpack.c.l.b16 %v445
    %v581 = vunpack.c.l.b16 %v446
    %v582 = vunpack.c.l.b16 %v447
    %v583 = vunpack.c.l.b16 %v448
    %v584 = vunpack.c.l.b16 %v449
    %v585 = vunpack.c.l.b16 %v450
    %v586 = vunpack.c.l.b16 %v451
    %v587 = vunpack.c.l.b16 %v452
    %v588 = vunpack.c.l.b16 %v453
    %v589 = vunpack.c.l.b16 %v454
    %v590 = vunpack.c.l.b16 %v455
    %v591 = vunpack.c.l.b16 %v456
    %v592 = vunpack.c.l.b16 %v457
    %v593 = vunpack.c.l.b16 %v458
    %v594 = vunpack.c.l.b16 %v459
    %v595 = vunpack.c.l.b16 %v460
    %v596 = vunpack.c.l.b16 %v461
    %v597 = vunpack.c.l.b16 %v462
    %v598 = vpack.c.b16 %v535, %v534
    %v599 = vpack.c.b16 %v537, %v536
    %v600 = vpack.c.b16 %v539, %v538
    %v601 = vpack.c.b16 %v541, %v540
    %v602 = vpack.c.b16 %v543, %v542
    %v603 = vpack.c.b16 %v545, %v544
    %v604 = vpack.c.b16 %v547, %v546
    %v605 = vpack.c.b16 %v549, %v548
    %v606 = vpack.c.b16 %v551, %v550
    %v607 = vpack.c.b16 %v553, %v552
    %v608 = vpack.c.b16 %v555, %v554
    %v609 = vpack.c.b16 %v557, %v556
    %v610 = vpack.c.b16 %v559, %v558
    %v611 = vpack.c.b16 %v561, %v560
    %v612 = vpack.c.b16 %v563, %v562
    %v613 = vpack.c.b16 %v565, %v564
    %v614 = vpack.c.b16 %v567, %v566
    %v615 = vpack.c.b16 %v569, %v568
    %v616 = vpack.c.b16 %v571, %v570
    %v617 = vpack.c.b16 %v573, %v572
    %v618 = vpack.c.b16 %v575, %v574
    %v619 = vpack.c.b16 %v577, %v576
    %v620 = vpack.c.b16 %v579, %v578
    %v621 = vpack.c.b16 %v581, %v580
    %v622 = vpack.c.b16 %v583, %v582
    %v623 = vpack.c.b16 %v585, %v584
    %v624 = vpack.c.b16 %v587, %v586
    %v625 = vpack.c.b16 %v589, %v588
    %v626 = vpack.c.b16 %v591, %v590
    %v627 = vpack.c.b16 %v593, %v592
    %v628 = vpack.c.b16 %v595, %v594
    %v629 = vpack.c.b16 %v597, %v596
    %662 = vmatprep.subr.bf16.mxu0 0
    %663 = vmatpush1.bf16.msra.mxu0 %v598
    %664 = vmatprep.subr.bf16.mxu0 0
    %665 = vmatpush1.bf16.msra.mxu0 %v599
    %666 = vmatprep.subr.bf16.mxu0 0
    %667 = vmatpush1.bf16.msra.mxu0 %v600
    %668 = vmatprep.subr.bf16.mxu0 0
    %669 = vmatpush1.bf16.msra.mxu0 %v601
    %670 = vmatprep.subr.bf16.mxu0 0
    %671 = vmatpush1.bf16.msra.mxu0 %v602
    %672 = vmatprep.subr.bf16.mxu0 0
    %673 = vmatpush1.bf16.msra.mxu0 %v603
    %674 = vmatprep.subr.bf16.mxu0 0
    %675 = vmatpush1.bf16.msra.mxu0 %v604
    %676 = vmatprep.subr.bf16.mxu0 0
    %677 = vmatpush1.bf16.msra.mxu0 %v605
    %678 = vmatprep.subr.bf16.mxu0 0
    %679 = vmatpush1.bf16.msra.mxu0 %v606
    %680 = vmatprep.subr.bf16.mxu0 0
    %681 = vmatpush1.bf16.msra.mxu0 %v607
    %682 = vmatprep.subr.bf16.mxu0 0
    %683 = vmatpush1.bf16.msra.mxu0 %v608
    %684 = vmatprep.subr.bf16.mxu0 0
    %685 = vmatpush1.bf16.msra.mxu0 %v609
    %686 = vmatprep.subr.bf16.mxu0 0
    %687 = vmatpush1.bf16.msra.mxu0 %v610
    %688 = vmatprep.subr.bf16.mxu0 0
    %689 = vmatpush1.bf16.msra.mxu0 %v611
    %690 = vmatprep.subr.bf16.mxu0 0
    %691 = vmatpush1.bf16.msra.mxu0 %v612
    %692 = vmatprep.subr.bf16.mxu0 0
    %693 = vmatpush1.bf16.msra.mxu0 %v613
    %694 = vmatprep.mubr.bf16.mxu0 %v396
    %695 = vmatmul.mubr.bf16.gmra.mrb[0].mxu0 %v395
    %v696 = vpop.f32.mrb[0].mxu0
    %v697 = vadd.f32 %v468, %v696
    %v698 = vpop.f32.mrb[0].mxu0
    %v699 = vpop.f32.mrb[0].mxu0
    %v700 = vpop.f32.mrb[0].mxu0
    %701 = vdwg.mxu0
    %702 = vmatprep.subr.bf16.mxu0 0
    %703 = vmatpush1.bf16.msra.mxu0 %v614
    %704 = vmatprep.subr.bf16.mxu0 0
    %705 = vmatpush1.bf16.msra.mxu0 %v615
    %706 = vmatprep.subr.bf16.mxu0 0
    %707 = vmatpush1.bf16.msra.mxu0 %v616
    %708 = vmatprep.subr.bf16.mxu0 0
    %709 = vmatpush1.bf16.msra.mxu0 %v617
    %710 = vmatprep.subr.bf16.mxu0 0
    %711 = vmatpush1.bf16.msra.mxu0 %v618
    %712 = vmatprep.subr.bf16.mxu0 0
    %713 = vmatpush1.bf16.msra.mxu0 %v619
    %714 = vmatprep.subr.bf16.mxu0 0
    %715 = vmatpush1.bf16.msra.mxu0 %v620
    %716 = vmatprep.subr.bf16.mxu0 0
    %717 = vmatpush1.bf16.msra.mxu0 %v621
    %718 = vmatprep.subr.bf16.mxu0 0
    %719 = vmatpush1.bf16.msra.mxu0 %v622
    %720 = vmatprep.subr.bf16.mxu0 0
    %721 = vmatpush1.bf16.msra.mxu0 %v623
    %722 = vmatprep.subr.bf16.mxu0 0
    %723 = vmatpush1.bf16.msra.mxu0 %v624
    %724 = vmatprep.subr.bf16.mxu0 0
    %725 = vmatpush1.bf16.msra.mxu0 %v625
    %726 = vmatprep.subr.bf16.mxu0 0
    %727 = vmatpush1.bf16.msra.mxu0 %v626
    %728 = vmatprep.subr.bf16.mxu0 0
    %729 = vmatpush1.bf16.msra.mxu0 %v627
    %730 = vmatprep.subr.bf16.mxu0 0
    %731 = vmatpush1.bf16.msra.mxu0 %v628
    %732 = vmatprep.subr.bf16.mxu0 0
    %733 = vmatpush1.bf16.msra.mxu0 %v629
    %734 = vmatprep.mubr.bf16.mxu0 %v398
    %735 = vmatmul.mubr.bf16.gmra.mrb[0].mxu0 %v397
    %v736 = vpop.f32.mrb[0].mxu0
    %v737 = vadd.f32 %v697, %v736
    %v738 = vpop.f32.mrb[0].mxu0
    %v739 = vpop.f32.mrb[0].mxu0
    %v740 = vpop.f32.mrb[0].mxu0
    %741 = vdwg.mxu0
    %742 = vst [vmem:[#allocation8] sm:$0xf] %v737
    // Predicated region
    $region34: #{tpu_custom_call.1} parent=1 // pred_check
      _
    $region35: #{tpu_custom_call.1} parent=1 // pred_check_branch
      %744 = sbr.rel (0) target = $region37
    $region36: #{tpu_custom_call.1} parent=1 // pred_region
      %s746 = ssub.s32 64, 64
      %747 = vsyncadd [#allocation4], %s746
      %s749 = sshll.u32 [#allocation8], 4
      %s750 = int_to_ptr.vmem [resolvable:$true] %s749
      %752 = dma.vmem_to_hbm [thread:$0]  %s750, 64, %s5, [#allocation4]
    $region37: #{tpu_custom_call.1} parent=1 // pred_fallthru
      _
    // Predicated region
    $region38: #{tpu_custom_call.1} parent=1 // pred_check
      _
    $region39: #{tpu_custom_call.1} parent=1 // pred_check_branch
      %754 = sbr.rel (0) target = $region41
    $region40: #{tpu_custom_call.1} parent=1 // pred_region
      %755 = dma.done [#allocation4], 64
    $region41: #{tpu_custom_call.1} parent=1 // pred_fallthru
      _
    %756 = vsyncpa [#allocation3], 1
    %757 = vsyncpa [#allocation6], 1
    %758 = vsyncpa [#allocation4], 1

// kernel: tpu_custom_call.1
$region0: #{tpu_custom_call.1}
  #allocation0 [shape = 'u32[]', space=smem, size = 0x4, offset = 0x4, fixed_abs, tag = 'smem constant byte address 0x4 - core index']
  #allocation1 [shape = 'u32[144,128]{1,0:T(1,128)}', space=vmem, size = 0x12000, scoped, tag = 'internal scratch']
  %s0 = inlined_call_operand.hbm [shape: f32[4,128], index: 0, kind: input, shape index: {}]
  %s1 = inlined_call_operand.hbm [shape: bf16[128,512], index: 1, kind: input, shape index: {}]
  %s2 = inlined_call_operand.vmem [shape: f32[1,512], index: 2, kind: input, shape index: {}]
  %s3 = inlined_call_operand.hbm [shape: bf16[512,128], index: 3, kind: input, shape index: {}]
  %s4 = inlined_call_operand.vmem [shape: f32[1,128], index: 4, kind: input, shape index: {}]
  %s5 = inlined_call_operand.hbm [shape: f32[4,128], index: 5, kind: output, shape index: {}]
  %s6 = sld [smem:[#allocation0]]
  $region42: #{tpu_custom_call.1} parent=0
    _
  %s8 = ssub.s32 1, %s6
  %s9 = scalar_select 0, %s8, %s6
  $region1: #{tpu_custom_call.1} parent=0
    #allocation2 [shape = 'u8[2048]{0}', space=vmem, size = 0x800, scoped, tag = 'input window, operand 0, single buffered']
    #allocation3 [shape = 's32[1]{0}', space=sflag, size = 0x4, scoped, tag = 'scoped memory for tpu_custom_call.1']
    #allocation4 [shape = 's32[1]{0}', space=sflag, size = 0x4, scoped, tag = 'scoped memory for tpu_custom_call.1']
    #allocation5 [shape = 'u8[131072]{0}', space=vmem, size = 0x20000, scoped, tag = 'input window, operand 1, single buffered']
    #allocation6 [shape = 's32[1]{0}', space=sflag, size = 0x4, scoped, tag = 'scoped memory for tpu_custom_call.1']
    #allocation7 [shape = 'u8[131072]{0}', space=vmem, size = 0x20000, scoped, tag = 'input window, operand 3, single buffered']
    #allocation8 [shape = 'u8[2048]{0}', space=vmem, size = 0x800, scoped, tag = 'output window, operand 0, single buffered']
    %10 = vsyncpa [#allocation3], 0
    %11 = vsyncpa [#allocation6], 0
    %12 = vsyncpa [#allocation4], 0
    // Predicated region
    $region2: #{tpu_custom_call.1} parent=1 // pred_check
      _
    $region3: #{tpu_custom_call.1} parent=1 // pred_check_branch
      %14 = sbr.rel (0) target = $region5
    $region4: #{tpu_custom_call.1} parent=1 // pred_region
      %s16 = ssub.s32 64, 64
      %17 = vsyncadd [#allocation3], %s16
      %s19 = sshll.u32 [#allocation2], 4
      %s20 = int_to_ptr.vmem [resolvable:$true] %s19
      %22 = dma.hbm_to_vmem [thread:$0]  %s0, 64, %s20, [#allocation3]
    $region5: #{tpu_custom_call.1} parent=1 // pred_fallthru
      _
    // Predicated region
    $region6: #{tpu_custom_call.1} parent=1 // pred_check
      _
    $region7: #{tpu_custom_call.1} parent=1 // pred_check_branch
      %24 = sbr.rel (0) target = $region9
    $region8: #{tpu_custom_call.1} parent=1 // pred_region
      %s26 = ssub.s32 4096, 4096
      %27 = vsyncadd [#allocation6], %s26
      %s28 = sshll.u32 [#allocation5], 4
      %s29 = int_to_ptr.vmem [resolvable:$true] %s28
      %34 = dma.hbm_to_vmem [thread:$0]  %s1, 4096, %s29, [#allocation6], 256, 256, 16
    $region9: #{tpu_custom_call.1} parent=1 // pred_fallthru
      _
    // Predicated region
    $region10: #{tpu_custom_call.1} parent=1 // pred_check
      _
    $region11: #{tpu_custom_call.1} parent=1 // pred_check_branch
      %36 = sbr.rel (0) target = $region13
    $region12: #{tpu_custom_call.1} parent=1 // pred_region
      _
    $region13: #{tpu_custom_call.1} parent=1 // pred_fallthru
      _
    // Predicated region
    $region14: #{tpu_custom_call.1} parent=1 // pred_check
      _
    $region15: #{tpu_custom_call.1} parent=1 // pred_check_branch
      %38 = sbr.rel (0) target = $region17
    $region16: #{tpu_custom_call.1} parent=1 // pred_region
      %s40 = ssub.s32 4096, 4096
      %41 = vsyncadd [#allocation6], %s40
      %s42 = sshll.u32 [#allocation7], 4
      %s43 = int_to_ptr.vmem [resolvable:$true] %s42
      %48 = dma.hbm_to_vmem [thread:$0]  %s3, 4096, %s43, [#allocation6], 64, 64, 4
    $region17: #{tpu_custom_call.1} parent=1 // pred_fallthru
      _
    // Predicated region
    $region18: #{tpu_custom_call.1} parent=1 // pred_check
      _
    $region19: #{tpu_custom_call.1} parent=1 // pred_check_branch
      %50 = sbr.rel (0) target = $region21
    $region20: #{tpu_custom_call.1} parent=1 // pred_region
      _
    $region21: #{tpu_custom_call.1} parent=1 // pred_fallthru
      _
    // Predicated region
    $region22: #{tpu_custom_call.1} parent=1 // pred_check
      _
    $region23: #{tpu_custom_call.1} parent=1 // pred_check_branch
      %52 = sbr.rel (0) target = $region25
    $region24: #{tpu_custom_call.1} parent=1 // pred_region
      %53 = dma.done [#allocation3], 64
    $region25: #{tpu_custom_call.1} parent=1 // pred_fallthru
      _
    // Predicated region
    $region26: #{tpu_custom_call.1} parent=1 // pred_check
      _
    $region27: #{tpu_custom_call.1} parent=1 // pred_check_branch
      %55 = sbr.rel (0) target = $region29
    $region28: #{tpu_custom_call.1} parent=1 // pred_region
      %56 = dma.done [#allocation6], 4096
    $region29: #{tpu_custom_call.1} parent=1 // pred_fallthru
      _
    // Predicated region
    $region30: #{tpu_custom_call.1} parent=1 // pred_check
      _
    $region31: #{tpu_custom_call.1} parent=1 // pred_check_branch
      %58 = sbr.rel (0) target = $region33
    $region32: #{tpu_custom_call.1} parent=1 // pred_region
      %59 = dma.done [#allocation6], 4096
    $region33: #{tpu_custom_call.1} parent=1 // pred_fallthru
      _
    %v61 = vld [vmem:[#allocation2] sm:$0xf]
    %v62 = vpack.c.bf16 %v61, %v61
    %v63 = vld [vmem:[#allocation5] sm:$0xff]
    %v64 = vld [vmem:[#allocation5 + $0x8] sm:$0xff]
    %v65 = vld [vmem:[#allocation5 + $0x10] sm:$0xff]
    %v66 = vld [vmem:[#allocation5 + $0x18] sm:$0xff]
    %v67 = vld [vmem:[#allocation5 + $0x20] sm:$0xff]
    %v68 = vld [vmem:[#allocation5 + $0x28] sm:$0xff]
    %v69 = vld [vmem:[#allocation5 + $0x30] sm:$0xff]
    %v70 = vld [vmem:[#allocation5 + $0x38] sm:$0xff]
    %v71 = vld [vmem:[#allocation5 + $0x40] sm:$0xff]
    %v72 = vld [vmem:[#allocation5 + $0x48] sm:$0xff]
    %v73 = vld [vmem:[#allocation5 + $0x50] sm:$0xff]
    %v74 = vld [vmem:[#allocation5 + $0x58] sm:$0xff]
    %v75 = vld [vmem:[#allocation5 + $0x60] sm:$0xff]
    %v76 = vld [vmem:[#allocation5 + $0x68] sm:$0xff]
    %v77 = vld [vmem:[#allocation5 + $0x70] sm:$0xff]
    %v78 = vld [vmem:[#allocation5 + $0x78] sm:$0xff]
    %v79 = vld [vmem:[#allocation5 + $0x80] sm:$0xff]
    %v80 = vld [vmem:[#allocation5 + $0x88] sm:$0xff]
    %v81 = vld [vmem:[#allocation5 + $0x90] sm:$0xff]
    %v82 = vld [vmem:[#allocation5 + $0x98] sm:$0xff]
    %v83 = vld [vmem:[#allocation5 + $0xa0] sm:$0xff]
    %v84 = vld [vmem:[#allocation5 + $0xa8] sm:$0xff]
    %v85 = vld [vmem:[#allocation5 + $0xb0] sm:$0xff]
    %v86 = vld [vmem:[#allocation5 + $0xb8] sm:$0xff]
    %v87 = vld [vmem:[#allocation5 + $0xc0] sm:$0xff]
    %v88 = vld [vmem:[#allocation5 + $0xc8] sm:$0xff]
    %v89 = vld [vmem:[#allocation5 + $0xd0] sm:$0xff]
    %v90 = vld [vmem:[#allocation5 + $0xd8] sm:$0xff]
    %v91 = vld [vmem:[#allocation5 + $0xe0] sm:$0xff]
    %v92 = vld [vmem:[#allocation5 + $0xe8] sm:$0xff]
    %v93 = vld [vmem:[#allocation5 + $0xf0] sm:$0xff]
    %v94 = vld [vmem:[#allocation5 + $0xf8] sm:$0xff]
    %v95 = vld [vmem:[%s2] sm:$0xf]
    %v97 = vlaneseq
    %v98 = vshrl.u32 %v97, 7
    %v99 = vsub.s32 0, %v98
    %v100 = vrot.slane %v95, %v99
    %v101 = vlaneseq
    %v102 = vshrl.u32 %v101, 7
    %v103 = vsub.s32 1, %v102
    %v104 = vrot.slane %v95, %v103
    %v105 = vlaneseq
    %v106 = vshrl.u32 %v105, 7
    %v107 = vsub.s32 2, %v106
    %v108 = vrot.slane %v95, %v107
    %v109 = vlaneseq
    %v110 = vshrl.u32 %v109, 7
    %v111 = vsub.s32 3, %v110
    %v112 = vrot.slane %v95, %v111
    %v149 = vunpack.c.l.b16 %v63
    %v150 = vunpack.c.h.b16 %v63
    %v151 = vunpack.c.l.b16 %v64
    %v152 = vunpack.c.h.b16 %v64
    %v153 = vunpack.c.l.b16 %v65
    %v154 = vunpack.c.h.b16 %v65
    %v155 = vunpack.c.l.b16 %v66
    %v156 = vunpack.c.h.b16 %v66
    %v157 = vunpack.c.l.b16 %v67
    %v158 = vunpack.c.h.b16 %v67
    %v159 = vunpack.c.l.b16 %v68
    %v160 = vunpack.c.h.b16 %v68
    %v161 = vunpack.c.l.b16 %v69
    %v162 = vunpack.c.h.b16 %v69
    %v163 = vunpack.c.l.b16 %v70
    %v164 = vunpack.c.h.b16 %v70
    %v165 = vunpack.c.l.b16 %v71
    %v166 = vunpack.c.h.b16 %v71
    %v167 = vunpack.c.l.b16 %v72
    %v168 = vunpack.c.h.b16 %v72
    %v169 = vunpack.c.l.b16 %v73
    %v170 = vunpack.c.h.b16 %v73
    %v171 = vunpack.c.l.b16 %v74
    %v172 = vunpack.c.h.b16 %v74
    %v173 = vunpack.c.l.b16 %v75
    %v174 = vunpack.c.h.b16 %v75
    %v175 = vunpack.c.l.b16 %v76
    %v176 = vunpack.c.h.b16 %v76
    %v177 = vunpack.c.l.b16 %v77
    %v178 = vunpack.c.h.b16 %v77
    %v179 = vunpack.c.l.b16 %v78
    %v180 = vunpack.c.h.b16 %v78
    %v181 = vunpack.c.l.b16 %v79
    %v182 = vunpack.c.h.b16 %v79
    %v183 = vunpack.c.l.b16 %v80
    %v184 = vunpack.c.h.b16 %v80
    %v185 = vunpack.c.l.b16 %v81
    %v186 = vunpack.c.h.b16 %v81
    %v187 = vunpack.c.l.b16 %v82
    %v188 = vunpack.c.h.b16 %v82
    %v189 = vunpack.c.l.b16 %v83
    %v190 = vunpack.c.h.b16 %v83
    %v191 = vunpack.c.l.b16 %v84
    %v192 = vunpack.c.h.b16 %v84
    %v193 = vunpack.c.l.b16 %v85
    %v194 = vunpack.c.h.b16 %v85
    %v195 = vunpack.c.l.b16 %v86
    %v196 = vunpack.c.h.b16 %v86
    %v197 = vunpack.c.l.b16 %v87
    %v198 = vunpack.c.h.b16 %v87
    %v199 = vunpack.c.l.b16 %v88
    %v200 = vunpack.c.h.b16 %v88
    %v201 = vunpack.c.l.b16 %v89
    %v202 = vunpack.c.h.b16 %v89
    %v203 = vunpack.c.l.b16 %v90
    %v204 = vunpack.c.h.b16 %v90
    %v205 = vunpack.c.l.b16 %v91
    %v206 = vunpack.c.h.b16 %v91
    %v207 = vunpack.c.l.b16 %v92
    %v208 = vunpack.c.h.b16 %v92
    %v209 = vunpack.c.l.b16 %v93
    %v210 = vunpack.c.h.b16 %v93
    %v211 = vunpack.c.l.b16 %v94
    %v212 = vunpack.c.h.b16 %v94
    %v213 = vpack.c.b16 %v153, %v149
    %v214 = vpack.c.b16 %v154, %v150
    %v215 = vpack.c.b16 %v155, %v151
    %v216 = vpack.c.b16 %v156, %v152
    %v217 = vpack.c.b16 %v161, %v157
    %v218 = vpack.c.b16 %v162, %v158
    %v219 = vpack.c.b16 %v163, %v159
    %v220 = vpack.c.b16 %v164, %v160
    %v221 = vpack.c.b16 %v169, %v165
    %v222 = vpack.c.b16 %v170, %v166
    %v223 = vpack.c.b16 %v171, %v167
    %v224 = vpack.c.b16 %v172, %v168
    %v225 = vpack.c.b16 %v177, %v173
    %v226 = vpack.c.b16 %v178, %v174
    %v227 = vpack.c.b16 %v179, %v175
    %v228 = vpack.c.b16 %v180, %v176
    %v229 = vpack.c.b16 %v185, %v181
    %v230 = vpack.c.b16 %v186, %v182
    %v231 = vpack.c.b16 %v187, %v183
    %v232 = vpack.c.b16 %v188, %v184
    %v233 = vpack.c.b16 %v193, %v189
    %v234 = vpack.c.b16 %v194, %v190
    %v235 = vpack.c.b16 %v195, %v191
    %v236 = vpack.c.b16 %v196, %v192
    %v237 = vpack.c.b16 %v201, %v197
    %v238 = vpack.c.b16 %v202, %v198
    %v239 = vpack.c.b16 %v203, %v199
    %v240 = vpack.c.b16 %v204, %v200
    %v241 = vpack.c.b16 %v209, %v205
    %v242 = vpack.c.b16 %v210, %v206
    %v243 = vpack.c.b16 %v211, %v207
    %v244 = vpack.c.b16 %v212, %v208
    %277 = vmatprep.subr.bf16.mxu0 %v214
    %278 = vmatpush1.bf16.msra.mxu0 %v213
    %279 = vmatprep.subr.bf16.mxu0 %v218
    %280 = vmatpush1.bf16.msra.mxu0 %v217
    %281 = vmatprep.subr.bf16.mxu0 %v222
    %282 = vmatpush1.bf16.msra.mxu0 %v221
    %283 = vmatprep.subr.bf16.mxu0 %v226
    %284 = vmatpush1.bf16.msra.mxu0 %v225
    %285 = vmatprep.subr.bf16.mxu0 %v230
    %286 = vmatpush1.bf16.msra.mxu0 %v229
    %287 = vmatprep.subr.bf16.mxu0 %v234
    %288 = vmatpush1.bf16.msra.mxu0 %v233
    %289 = vmatprep.subr.bf16.mxu0 %v238
    %290 = vmatpush1.bf16.msra.mxu0 %v237
    %291 = vmatprep.subr.bf16.mxu0 %v242
    %292 = vmatpush1.bf16.msra.mxu0 %v241
    %293 = vmatprep.subr.bf16.mxu0 0
    %294 = vmatpush1.bf16.msra.mxu0 0
    %295 = vmatprep.subr.bf16.mxu0 0
    %296 = vmatpush1.bf16.msra.mxu0 0
    %297 = vmatprep.subr.bf16.mxu0 0
    %298 = vmatpush1.bf16.msra.mxu0 0
    %299 = vmatprep.subr.bf16.mxu0 0
    %300 = vmatpush1.bf16.msra.mxu0 0
    %301 = vmatprep.subr.bf16.mxu0 0
    %302 = vmatpush1.bf16.msra.mxu0 0
    %303 = vmatprep.subr.bf16.mxu0 0
    %304 = vmatpush1.bf16.msra.mxu0 0
    %305 = vmatprep.subr.bf16.mxu0 0
    %306 = vmatpush1.bf16.msra.mxu0 0
    %307 = vmatprep.subr.bf16.mxu0 0
    %308 = vmatpush1.bf16.msra.mxu0 0
    %309 = vmatprep.mubr.bf16.mxu0 0
    %310 = vmatmul.mubr.bf16.gmra.mrb[0].mxu0 %v62
    %v311 = vpop.f32.mrb[0].mxu0
    %v312 = vadd.f32 %v100, %v311
    %v313 = vpop.f32.mrb[0].mxu0
    %v314 = vadd.f32 %v104, %v313
    %v315 = vpop.f32.mrb[0].mxu0
    %v316 = vpop.f32.mrb[0].mxu0
    %317 = vdwg.mxu0
    %318 = vmatprep.subr.bf16.mxu0 %v216
    %319 = vmatpush1.bf16.msra.mxu0 %v215
    %320 = vmatprep.subr.bf16.mxu0 %v220
    %321 = vmatpush1.bf16.msra.mxu0 %v219
    %322 = vmatprep.subr.bf16.mxu0 %v224
    %323 = vmatpush1.bf16.msra.mxu0 %v223
    %324 = vmatprep.subr.bf16.mxu0 %v228
    %325 = vmatpush1.bf16.msra.mxu0 %v227
    %326 = vmatprep.subr.bf16.mxu0 %v232
    %327 = vmatpush1.bf16.msra.mxu0 %v231
    %328 = vmatprep.subr.bf16.mxu0 %v236
    %329 = vmatpush1.bf16.msra.mxu0 %v235
    %330 = vmatprep.subr.bf16.mxu0 %v240
    %331 = vmatpush1.bf16.msra.mxu0 %v239
    %332 = vmatprep.subr.bf16.mxu0 %v244
    %333 = vmatpush1.bf16.msra.mxu0 %v243
    %334 = vmatprep.subr.bf16.mxu0 0
    %335 = vmatpush1.bf16.msra.mxu0 0
    %336 = vmatprep.subr.bf16.mxu0 0
    %337 = vmatpush1.bf16.msra.mxu0 0
    %338 = vmatprep.subr.bf16.mxu0 0
    %339 = vmatpush1.bf16.msra.mxu0 0
    %340 = vmatprep.subr.bf16.mxu0 0
    %341 = vmatpush1.bf16.msra.mxu0 0
    %342 = vmatprep.subr.bf16.mxu0 0
    %343 = vmatpush1.bf16.msra.mxu0 0
    %344 = vmatprep.subr.bf16.mxu0 0
    %345 = vmatpush1.bf16.msra.mxu0 0
    %346 = vmatprep.subr.bf16.mxu0 0
    %347 = vmatpush1.bf16.msra.mxu0 0
    %348 = vmatprep.subr.bf16.mxu0 0
    %349 = vmatpush1.bf16.msra.mxu0 0
    %350 = vmatprep.mubr.bf16.mxu0 0
    %351 = vmatmul.mubr.bf16.gmra.mrb[0].mxu0 %v62
    %v352 = vpop.f32.mrb[0].mxu0
    %v353 = vadd.f32 %v108, %v352
    %v354 = vpop.f32.mrb[0].mxu0
    %v355 = vadd.f32 %v112, %v354
    %v356 = vpop.f32.mrb[0].mxu0
    %v357 = vpop.f32.mrb[0].mxu0
    %358 = vdwg.mxu0
    %v359 = vmul.f32 %v312, 0.5
    %v360 = vmul.f32 %v314, 0.5
    %v361 = vmul.f32 %v353, 0.5
    %v362 = vmul.f32 %v355, 0.5
    %v363 = vmul.f32 %v312, 0.044715
    %v364 = vmul.f32 %v314, 0.044715
    %v365 = vmul.f32 %v353, 0.044715
    %v366 = vmul.f32 %v355, 0.044715
    %v367 = vmul.f32 %v363, %v312
    %v368 = vmul.f32 %v364, %v314
    %v369 = vmul.f32 %v365, %v353
    %v370 = vmul.f32 %v366, %v355
    %v371 = vmul.f32 %v367, %v312
    %v372 = vmul.f32 %v368, %v314
    %v373 = vmul.f32 %v369, %v353
    %v374 = vmul.f32 %v370, %v355
    %v375 = vadd.f32 %v312, %v371
    %v376 = vadd.f32 %v314, %v372
    %v377 = vadd.f32 %v353, %v373
    %v378 = vadd.f32 %v355, %v374
    %v379 = vmul.f32 %v375, 0.7978846
    %v380 = vmul.f32 %v376, 0.7978846
    %v381 = vmul.f32 %v377, 0.7978846
    %v382 = vmul.f32 %v378, 0.7978846
    %v383 = vtanh.pop %v379
    %v384 = vtanh.pop %v380
    %v385 = vtanh.pop %v381
    %v386 = vtanh.pop %v382
    %v387 = vadd.f32 %v383, 1.0
    %v388 = vadd.f32 %v384, 1.0
    %v389 = vadd.f32 %v385, 1.0
    %v390 = vadd.f32 %v386, 1.0
    %v391 = vmul.f32 %v359, %v387
    %v392 = vmul.f32 %v360, %v388
    %v393 = vmul.f32 %v361, %v389
    %v394 = vmul.f32 %v362, %v390
    %v395 = vpack.c.bf16 %v391, %v391
    %v396 = vpack.c.bf16 %v392, %v392
    %v397 = vpack.c.bf16 %v393, %v393
    %v398 = vpack.c.bf16 %v394, %v394
    %v399 = vld [vmem:[#allocation7] sm:$0xf]
    %v400 = vld [vmem:[#allocation7 + $0x4] sm:$0xf]
    %v401 = vld [vmem:[#allocation7 + $0x8] sm:$0xf]
    %v402 = vld [vmem:[#allocation7 + $0xc] sm:$0xf]
    %v403 = vld [vmem:[#allocation7 + $0x10] sm:$0xf]
    %v404 = vld [vmem:[#allocation7 + $0x14] sm:$0xf]
    %v405 = vld [vmem:[#allocation7 + $0x18] sm:$0xf]
    %v406 = vld [vmem:[#allocation7 + $0x1c] sm:$0xf]
    %v407 = vld [vmem:[#allocation7 + $0x20] sm:$0xf]
    %v408 = vld [vmem:[#allocation7 + $0x24] sm:$0xf]
    %v409 = vld [vmem:[#allocation7 + $0x28] sm:$0xf]
    %v410 = vld [vmem:[#allocation7 + $0x2c] sm:$0xf]
    %v411 = vld [vmem:[#allocation7 + $0x30] sm:$0xf]
    %v412 = vld [vmem:[#allocation7 + $0x34] sm:$0xf]
    %v413 = vld [vmem:[#allocation7 + $0x38] sm:$0xf]
    %v414 = vld [vmem:[#allocation7 + $0x3c] sm:$0xf]
    %v415 = vld [vmem:[#allocation7 + $0x40] sm:$0xf]
    %v416 = vld [vmem:[#allocation7 + $0x44] sm:$0xf]
    %v417 = vld [vmem:[#allocation7 + $0x48] sm:$0xf]
    %v418 = vld [vmem:[#allocation7 + $0x4c] sm:$0xf]
    %v419 = vld [vmem:[#allocation7 + $0x50] sm:$0xf]
    %v420 = vld [vmem:[#allocation7 + $0x54] sm:$0xf]
    %v421 = vld [vmem:[#allocation7 + $0x58] sm:$0xf]
    %v422 = vld [vmem:[#allocation7 + $0x5c] sm:$0xf]
    %v423 = vld [vmem:[#allocation7 + $0x60] sm:$0xf]
    %v424 = vld [vmem:[#allocation7 + $0x64] sm:$0xf]
    %v425 = vld [vmem:[#allocation7 + $0x68] sm:$0xf]
    %v426 = vld [vmem:[#allocation7 + $0x6c] sm:$0xf]
    %v427 = vld [vmem:[#allocation7 + $0x70] sm:$0xf]
    %v428 = vld [vmem:[#allocation7 + $0x74] sm:$0xf]
    %v429 = vld [vmem:[#allocation7 + $0x78] sm:$0xf]
    %v430 = vld [vmem:[#allocation7 + $0x7c] sm:$0xf]
    %v431 = vld [vmem:[#allocation7 + $0x80] sm:$0xf]
    %v432 = vld [vmem:[#allocation7 + $0x84] sm:$0xf]
    %v433 = vld [vmem:[#allocation7 + $0x88] sm:$0xf]
    %v434 = vld [vmem:[#allocation7 + $0x8c] sm:$0xf]
    %v435 = vld [vmem:[#allocation7 + $0x90] sm:$0xf]
    %v436 = vld [vmem:[#allocation7 + $0x94] sm:$0xf]
    %v437 = vld [vmem:[#allocation7 + $0x98] sm:$0xf]
    %v438 = vld [vmem:[#allocation7 + $0x9c] sm:$0xf]
    %v439 = vld [vmem:[#allocation7 + $0xa0] sm:$0xf]
    %v440 = vld [vmem:[#allocation7 + $0xa4] sm:$0xf]
    %v441 = vld [vmem:[#allocation7 + $0xa8] sm:$0xf]
    %v442 = vld [vmem:[#allocation7 + $0xac] sm:$0xf]
    %v443 = vld [vmem:[#allocation7 + $0xb0] sm:$0xf]
    %v444 = vld [vmem:[#allocation7 + $0xb4] sm:$0xf]
    %v445 = vld [vmem:[#allocation7 + $0xb8] sm:$0xf]
    %v446 = vld [vmem:[#allocation7 + $0xbc] sm:$0xf]
    %v447 = vld [vmem:[#allocation7 + $0xc0] sm:$0xf]
    %v448 = vld [vmem:[#allocation7 + $0xc4] sm:$0xf]
    %v449 = vld [vmem:[#allocation7 + $0xc8] sm:$0xf]
    %v450 = vld [vmem:[#allocation7 + $0xcc] sm:$0xf]
    %v451 = vld [vmem:[#allocation7 + $0xd0] sm:$0xf]
    %v452 = vld [vmem:[#allocation7 + $0xd4] sm:$0xf]
    %v453 = vld [vmem:[#allocation7 + $0xd8] sm:$0xf]
    %v454 = vld [vmem:[#allocation7 + $0xdc] sm:$0xf]
    %v455 = vld [vmem:[#allocation7 + $0xe0] sm:$0xf]
    %v456 = vld [vmem:[#allocation7 + $0xe4] sm:$0xf]
    %v457 = vld [vmem:[#allocation7 + $0xe8] sm:$0xf]
    %v458 = vld [vmem:[#allocation7 + $0xec] sm:$0xf]
    %v459 = vld [vmem:[#allocation7 + $0xf0] sm:$0xf]
    %v460 = vld [vmem:[#allocation7 + $0xf4] sm:$0xf]
    %v461 = vld [vmem:[#allocation7 + $0xf8] sm:$0xf]
    %v462 = vld [vmem:[#allocation7 + $0xfc] sm:$0xf]
    %v463 = vld [vmem:[%s4] sm:$0x1]
    %v465 = vlaneseq
    %v466 = vshrl.u32 %v465, 7
    %v467 = vsub.s32 0, %v466
    %v468 = vrot.slane %v463, %v467
    %v534 = vunpack.c.l.b16 %v399
    %v535 = vunpack.c.l.b16 %v400
    %v536 = vunpack.c.l.b16 %v401
    %v537 = vunpack.c.l.b16 %v402
    %v538 = vunpack.c.l.b16 %v403
    %v539 = vunpack.c.l.b16 %v404
    %v540 = vunpack.c.l.b16 %v405
    %v541 = vunpack.c.l.b16 %v406
    %v542 = vunpack.c.l.b16 %v407
    %v543 = vunpack.c.l.b16 %v408
    %v544 = vunpack.c.l.b16 %v409
    %v545 = vunpack.c.l.b16 %v410
    %v546 = vunpack.c.l.b16 %v411
    %v547 = vunpack.c.l.b16 %v412
    %v548 = vunpack.c.l.b16 %v413
    %v549 = vunpack.c.l.b16 %v414
    %v550 = vunpack.c.l.b16 %v415
    %v551 = vunpack.c.l.b16 %v416
    %v552 = vunpack.c.l.b16 %v417
    %v553 = vunpack.c.l.b16 %v418
    %v554 = vunpack.c.l.b16 %v419
    %v555 = vunpack.c.l.b16 %v420
    %v556 = vunpack.c.l.b16 %v421
    %v557 = vunpack.c.l.b16 %v422
    %v558 = vunpack.c.l.b16 %v423
    %v559 = vunpack.c.l.b16 %v424
    %v560 = vunpack.c.l.b16 %v425
    %v561 = vunpack.c.l.b16 %v426
    %v562 = vunpack.c.l.b16 %v427
    %v563 = vunpack.c.l.b16 %v428
    %v564 = vunpack.c.l.b16 %v429
    %v565 = vunpack.c.l.b16 %v430
    %v566 = vunpack.c.l.b16 %v431
    %v567 = vunpack.c.l.b16 %v432
    %v568 = vunpack.c.l.b16 %v433
    %v569 = vunpack.c.l.b16 %v434
    %v570 = vunpack.c.l.b16 %v435
    %v571 = vunpack.c.l.b16 %v436
    %v572 = vunpack.c.l.b16 %v437
    %v573 = vunpack.c.l.b16 %v438
    %v574 = vunpack.c.l.b16 %v439
    %v575 = vunpack.c.l.b16 %v440
    %v576 = vunpack.c.l.b16 %v441
    %v577 = vunpack.c.l.b16 %v442
    %v578 = vunpack.c.l.b16 %v443
    %v579 = vunpack.c.l.b16 %v444
    %v580 = vunpack.c.l.b16 %v445
    %v581 = vunpack.c.l.b16 %v446
    %v582 = vunpack.c.l.b16 %v447
    %v583 = vunpack.c.l.b16 %v448
    %v584 = vunpack.c.l.b16 %v449
    %v585 = vunpack.c.l.b16 %v450
    %v586 = vunpack.c.l.b16 %v451
    %v587 = vunpack.c.l.b16 %v452
    %v588 = vunpack.c.l.b16 %v453
    %v589 = vunpack.c.l.b16 %v454
    %v590 = vunpack.c.l.b16 %v455
    %v591 = vunpack.c.l.b16 %v456
    %v592 = vunpack.c.l.b16 %v457
    %v593 = vunpack.c.l.b16 %v458
    %v594 = vunpack.c.l.b16 %v459
    %v595 = vunpack.c.l.b16 %v460
    %v596 = vunpack.c.l.b16 %v461
    %v597 = vunpack.c.l.b16 %v462
    %v598 = vpack.c.b16 %v535, %v534
    %v599 = vpack.c.b16 %v537, %v536
    %v600 = vpack.c.b16 %v539, %v538
    %v601 = vpack.c.b16 %v541, %v540
    %v602 = vpack.c.b16 %v543, %v542
    %v603 = vpack.c.b16 %v545, %v544
    %v604 = vpack.c.b16 %v547, %v546
    %v605 = vpack.c.b16 %v549, %v548
    %v606 = vpack.c.b16 %v551, %v550
    %v607 = vpack.c.b16 %v553, %v552
    %v608 = vpack.c.b16 %v555, %v554
    %v609 = vpack.c.b16 %v557, %v556
    %v610 = vpack.c.b16 %v559, %v558
    %v611 = vpack.c.b16 %v561, %v560
    %v612 = vpack.c.b16 %v563, %v562
    %v613 = vpack.c.b16 %v565, %v564
    %v614 = vpack.c.b16 %v567, %v566
    %v615 = vpack.c.b16 %v569, %v568
    %v616 = vpack.c.b16 %v571, %v570
    %v617 = vpack.c.b16 %v573, %v572
    %v618 = vpack.c.b16 %v575, %v574
    %v619 = vpack.c.b16 %v577, %v576
    %v620 = vpack.c.b16 %v579, %v578
    %v621 = vpack.c.b16 %v581, %v580
    %v622 = vpack.c.b16 %v583, %v582
    %v623 = vpack.c.b16 %v585, %v584
    %v624 = vpack.c.b16 %v587, %v586
    %v625 = vpack.c.b16 %v589, %v588
    %v626 = vpack.c.b16 %v591, %v590
    %v627 = vpack.c.b16 %v593, %v592
    %v628 = vpack.c.b16 %v595, %v594
    %v629 = vpack.c.b16 %v597, %v596
    %662 = vmatprep.subr.bf16.mxu0 0
    %663 = vmatpush1.bf16.msra.mxu0 %v598
    %664 = vmatprep.subr.bf16.mxu0 0
    %665 = vmatpush1.bf16.msra.mxu0 %v599
    %666 = vmatprep.subr.bf16.mxu0 0
    %667 = vmatpush1.bf16.msra.mxu0 %v600
    %668 = vmatprep.subr.bf16.mxu0 0
    %669 = vmatpush1.bf16.msra.mxu0 %v601
    %670 = vmatprep.subr.bf16.mxu0 0
    %671 = vmatpush1.bf16.msra.mxu0 %v602
    %672 = vmatprep.subr.bf16.mxu0 0
    %673 = vmatpush1.bf16.msra.mxu0 %v603
    %674 = vmatprep.subr.bf16.mxu0 0
    %675 = vmatpush1.bf16.msra.mxu0 %v604
    %676 = vmatprep.subr.bf16.mxu0 0
    %677 = vmatpush1.bf16.msra.mxu0 %v605
    %678 = vmatprep.subr.bf16.mxu0 0
    %679 = vmatpush1.bf16.msra.mxu0 %v606
    %680 = vmatprep.subr.bf16.mxu0 0
    %681 = vmatpush1.bf16.msra.mxu0 %v607
    %682 = vmatprep.subr.bf16.mxu0 0
    %683 = vmatpush1.bf16.msra.mxu0 %v608
    %684 = vmatprep.subr.bf16.mxu0 0
    %685 = vmatpush1.bf16.msra.mxu0 %v609
    %686 = vmatprep.subr.bf16.mxu0 0
    %687 = vmatpush1.bf16.msra.mxu0 %v610
    %688 = vmatprep.subr.bf16.mxu0 0
    %689 = vmatpush1.bf16.msra.mxu0 %v611
    %690 = vmatprep.subr.bf16.mxu0 0
    %691 = vmatpush1.bf16.msra.mxu0 %v612
    %692 = vmatprep.subr.bf16.mxu0 0
    %693 = vmatpush1.bf16.msra.mxu0 %v613
    %694 = vmatprep.mubr.bf16.mxu0 %v396
    %695 = vmatmul.mubr.bf16.gmra.mrb[0].mxu0 %v395
    %v696 = vpop.f32.mrb[0].mxu0
    %v697 = vadd.f32 %v468, %v696
    %v698 = vpop.f32.mrb[0].mxu0
    %v699 = vpop.f32.mrb[0].mxu0
    %v700 = vpop.f32.mrb[0].mxu0
    %701 = vdwg.mxu0
    %702 = vmatprep.subr.bf16.mxu0 0
    %703 = vmatpush1.bf16.msra.mxu0 %v614
    %704 = vmatprep.subr.bf16.mxu0 0
    %705 = vmatpush1.bf16.msra.mxu0 %v615
    %706 = vmatprep.subr.bf16.mxu0 0
    %707 = vmatpush1.bf16.msra.mxu0 %v616
    %708 = vmatprep.subr.bf16.mxu0 0
    %709 = vmatpush1.bf16.msra.mxu0 %v617
    %710 = vmatprep.subr.bf16.mxu0 0
    %711 = vmatpush1.bf16.msra.mxu0 %v618
    %712 = vmatprep.subr.bf16.mxu0 0
    %713 = vmatpush1.bf16.msra.mxu0 %v619
    %714 = vmatprep.subr.bf16.mxu0 0
    %715 = vmatpush1.bf16.msra.mxu0 %v620
    %716 = vmatprep.subr.bf16.mxu0 0
    %717 = vmatpush1.bf16.msra.mxu0 %v621
    %718 = vmatprep.subr.bf16.mxu0 0
    %719 = vmatpush1.bf16.msra.mxu0 %v622
    %720 = vmatprep.subr.bf16.mxu0 0
    %721 = vmatpush1.bf16.msra.mxu0 %v623
    %722 = vmatprep.subr.bf16.mxu0 0
    %723 = vmatpush1.bf16.msra.mxu0 %v624
    %724 = vmatprep.subr.bf16.mxu0 0
    %725 = vmatpush1.bf16.msra.mxu0 %v625
    %726 = vmatprep.subr.bf16.mxu0 0
    %727 = vmatpush1.bf16.msra.mxu0 %v626
    %728 = vmatprep.subr.bf16.mxu0 0
    %729 = vmatpush1.bf16.msra.mxu0 %v627
    %730 = vmatprep.subr.bf16.mxu0 0
    %731 = vmatpush1.bf16.msra.mxu0 %v628
    %732 = vmatprep.subr.bf16.mxu0 0
    %733 = vmatpush1.bf16.msra.mxu0 %v629
    %734 = vmatprep.mubr.bf16.mxu0 %v398
    %735 = vmatmul.mubr.bf16.gmra.mrb[0].mxu0 %v397
    %v736 = vpop.f32.mrb[0].mxu0
    %v737 = vadd.f32 %v697, %v736
    %v738 = vpop.f32.mrb[0].mxu0
    %v739 = vpop.f32.mrb[0].mxu0
    %v740 = vpop.f32.mrb[0].mxu0
    %741 = vdwg.mxu0
    %742 = vst [vmem:[#allocation8] sm:$0xf] %v737
    // Predicated region
    $region34: #{tpu_custom_call.1} parent=1 // pred_check
      _
    $region35: #{tpu_custom_call.1} parent=1 // pred_check_branch
      %744 = sbr.rel (0) target = $region37
    $region36: #{tpu_custom_call.1} parent=1 // pred_region
      %s746 = ssub.s32 64, 64
      %747 = vsyncadd [#allocation4], %s746
      %s749 = sshll.u32 [#allocation8], 4
      %s750 = int_to_ptr.vmem [resolvable:$true] %s749
      %752 = dma.vmem_to_hbm [thread:$0]  %s750, 64, %s5, [#allocation4]
    $region37: #{tpu_custom_call.1} parent=1 // pred_fallthru
      _
    // Predicated region
    $region38: #{tpu_custom_call.1} parent=1 // pred_check
      _
    $region39: #{tpu_custom_call.1} parent=1 // pred_check_branch
      %754 = sbr.rel (0) target = $region41
    $region40: #{tpu_custom_call.1} parent=1 // pred_region
      %755 = dma.done [#allocation4], 64
    $region41: #{tpu_custom_call.1} parent=1 // pred_fallthru
      _
    %756 = vsyncpa [#allocation3], 1
    %757 = vsyncpa [#allocation6], 1
    %758 = vsyncpa [#allocation4], 1

</llo_original>
